<compile_context>
chip_gen: v6e
topology: v6e:2x2x1
jax: 0.10.0
libtpu: 0.0.40
codegen_flags: <defaults>
</compile_context>

<pallas_src>
import functools

import jax
import jax.numpy as jnp
from jax import lax
from jax.experimental import pallas as pl
from jax.experimental.pallas import tpu as pltpu

EPS = 1e-5
PAD_OFF = 8  # sublane-aligned start row of every padded-scratch interior

CONFIG = {
    "act_fn": "relu",
    "ch_nums": [4, 8, 16, 32],
    "conv_kernel_sizes": [3, 3, 3],
    "adaptive_pool_size": 2,
    "fully_connected_layer": [32, 16],
    "num_classes": 5,
    "dropout_conv": 0.1,   # identity at inference
    "dropout_fcl": 0.1,    # identity at inference
}

_VMEM = pl.BlockSpec(memory_space=pltpu.MemorySpace.VMEM)


def _act(x, name):
    name = name.lower()
    if name == "relu":
        return jnp.maximum(x, 0.0)
    if name == "leakyrelu":
        return jnp.where(x >= 0, x, 0.01 * x)
    if name == "elu":
        return jnp.where(x >= 0, x, jnp.exp(x) - 1.0)
    if name == "tanh":
        return jnp.tanh(x)
    raise ValueError(f"unknown activation {name}")


# ----------------------------------------------------------------------------
# Fused Pallas kernel: conv stack + FC head in one launch
# ----------------------------------------------------------------------------
def fused_cnn_kernel(x_ref,
                     w0_ref, w1_ref, w2_ref,
                     wf1_ref, wf2_ref, wf3_ref,
                     pk_ref,
                     o_ref,
                     *scratch_refs,
                     ksizes, pool_size, act_name, prepool_blocks):
    """Whole CNNModel forward (inference) on one TensorCore.

    x_ref   : (B, L0 + k0 - 1, C0) channels-last input; already holds both the
              F.pad(x, (1, 0)) zero and block-0's 'same' padding rows.
    w*_ref  : (K, Cin, Cout) bf16 conv taps, BN scale pre-folded.
    wf1_ref : (P, C3, F0) bf16 slice of the Linear1 weight (flatten = c*P+p),
              BN scale pre-folded.  wf2: (F0, F1) bf16.  wf3: (F1, 128) bf16,
              class dim zero-padded to a full lane tile.
    pk_ref  : (6, 128) f32 packed per-channel vectors:
              rows 0..2 conv-block shifts, 3/4 FC shifts, 5 final bias (padded).
    o_ref   : (B, 128) logits (lane-dense; wrapper slices to num_classes).
    scratch : padded-input staging buffers for blocks 1.. , followed by one
              exact-size pre-pool buffer per sublane-unaligned block.
    """
    f32, bf16 = jnp.float32, jnp.bfloat16
    B = x_ref.shape[0]
    n_blocks = len(ksizes)
    stage_refs = scratch_refs[:n_blocks - 1]
    prepool_refs = dict(zip(prepool_blocks, scratch_refs[n_blocks - 1:]))
    w_refs = (w0_ref, w1_ref, w2_ref)

    pooled2d = None                               # (B*L/2, Cout) after a block
    L = x_ref.shape[1] - (ksizes[0] - 1)          # conv-input length of block 0

    for i in range(n_blocks):
        w_ref = w_refs[i]
        k = ksizes[i]
        pad_l = (k - 1) // 2
        pad_r = (k - 1) - pad_l
        cout = w_ref.shape[-1]
        Lh = L // 2
        shift = pk_ref[i:i + 1, 0:cout]           # folded BN bias/shift (1, Cout)

        if i == 0:
            src_ref, base = x_ref, pad_l          # wrapper supplied padded rows
        else:
            src_ref, base = stage_refs[i - 1], PAD_OFF
            cprev = src_ref.shape[-1]
            # Zero ONLY the rows actually read as 'same' padding ...
            if pad_l:
                src_ref[:, PAD_OFF - pad_l:PAD_OFF, :] = \
                    jnp.zeros((B, pad_l, cprev), f32)
            if pad_r:
                src_ref[:, PAD_OFF + L:PAD_OFF + L + pad_r, :] = \
                    jnp.zeros((B, pad_r, cprev), f32)
            # ... and stage the previous pooled activation with ONE 3-D store.
            src_ref[:, PAD_OFF:PAD_OFF + L, :] = pooled2d.reshape(B, L, cprev)
        cin = src_ref.shape[-1]
        r0 = base - pad_l   # conv output l reads padded rows r0 + l + t

        if Lh % 8 == 0:
            # Conv + BN + act + MaxPool(2,2) fused via even/odd accumulation.
            # One (B*Lh, Cin)x(Cin, Cout) bf16 MXU matmul per tap & parity over
            # all batches; each parity is a contiguous dot-accumulate chain.
            acc_e = jnp.zeros((B * Lh, cout), f32)
            for t in range(k):
                xe = src_ref[:, pl.ds(r0 + t, Lh, 2), :].reshape(B * Lh, cin)
                acc_e = acc_e + jnp.dot(xe.astype(bf16), w_ref[t],
                                        preferred_element_type=f32)
            acc_o = jnp.zeros((B * Lh, cout), f32)
            for t in range(k):
                xo = src_ref[:, pl.ds(r0 + t + 1, Lh, 2), :].reshape(B * Lh, cin)
                acc_o = acc_o + jnp.dot(xo.astype(bf16), w_ref[t],
                                        preferred_element_type=f32)
            pooled2d = jnp.maximum(_act(acc_e + shift, act_name),
                                   _act(acc_o + shift, act_name))
        else:
            # Pooled length below one sublane tile: full-length conv into this
            # block's own exact-size pre-pool scratch, then stride-2 max.
            yp_ref = prepool_refs[i]
            acc = jnp.zeros((B * L, cout), f32)
            for t in range(k):
                xt = src_ref[:, r0 + t:r0 + t + L, :].reshape(B * L, cin)
                acc = acc + jnp.dot(xt.astype(bf16), w_ref[t],
                                    preferred_element_type=f32)
            yp_ref[...] = _act(acc + shift, act_name)
            pooled2d = jnp.maximum(yp_ref[pl.ds(0, B * Lh, 2), :],
                                   yp_ref[pl.ds(1, B * Lh, 2), :])
        L = Lh
        # Dropout(dropout_conv) after the block -> identity (inference).

    # ---- FC head: AdaptiveAvgPool1d(P) + Flatten + Linear1 folded into two
    # matmuls per segment; the averaging matrix is built in-kernel from iotas.
    F0 = wf1_ref.shape[-1]
    seg = L // pool_size
    bidx = lax.broadcasted_iota(jnp.int32, (B, B * L), 0)   # batch index
    cidx = lax.broadcasted_iota(jnp.int32, (B, B * L), 1)   # pooled2d row index
    pooled_bf = pooled2d.astype(bf16)
    z1 = jnp.zeros((B, F0), f32)
    for p in range(pool_size):
        lo = bidx * L + p * seg
        sp = jnp.where((cidx >= lo) & (cidx < lo + seg),
                       1.0 / seg, 0.0).astype(bf16)          # (B, B*L)
        seg_mean = jnp.dot(sp, pooled_bf, preferred_element_type=f32)  # (B, C3)
        z1 = z1 + jnp.dot(seg_mean.astype(bf16), wf1_ref[p],
                          preferred_element_type=f32)
    z1 = _act(z1 + pk_ref[3:4, 0:F0], act_name)              # Linear1 + BN + act
    F1 = wf2_ref.shape[-1]
    z2 = jnp.dot(z1.astype(bf16), wf2_ref[...], preferred_element_type=f32)
    z2 = _act(z2 + pk_ref[4:5, 0:F1], act_name)              # Linear2 + BN + act
    o_ref[...] = (jnp.dot(z2.astype(bf16), wf3_ref[...],
                          preferred_element_type=f32)
                  + pk_ref[5:6, :])                          # Linear3 (padded)
    # Dropout(dropout_fcl) layers -> identity (inference).


# ----------------------------------------------------------------------------
# Wrapper
# ----------------------------------------------------------------------------
def pallas_forward(x, kp, config):
    """x: (B, C0, L) float32 -- same layout as the PyTorch module input."""
    ks = config["conv_kernel_sizes"]
    P = config["adaptive_pool_size"]
    NC = config["num_classes"]
    chans = config["ch_nums"]
    B, _, Lraw = x.shape

    # F.pad(x, (1, 0)) and block-0's Conv1d 'same' padding fused into one tiny
    # host-side transpose+pad; everything downstream is one Pallas kernel.
    k0 = ks[0]
    pad_l0 = (k0 - 1) // 2
    pad_r0 = (k0 - 1) - pad_l0
    x_cl = jnp.transpose(x, (0, 2, 1)).astype(jnp.float32)          # (B, L, C0)
    x_pad = jnp.pad(x_cl, ((0, 0), (pad_l0 + 1, pad_r0), (0, 0)))

    # Static per-block geometry (conv-input lengths).
    L = Lraw + 1
    lengths = []
    for _ in ks:
        lengths.append(L)
        assert L % 2 == 0, "each conv block halves the length (MaxPool1d(2,2))"
        L //= 2
    assert L % P == 0

    # VMEM scratch: padded-input staging buffers for blocks 1.., plus one
    # exact-size pre-pool buffer per block whose pooled length is sublane-
    # unaligned (each gets its OWN scratch -> no under-sizing hazard).
    scratch = []
    for i in range(1, len(ks)):
        pad_ri = (ks[i] - 1) - (ks[i] - 1) // 2
        scratch.append(pltpu.VMEM((B, PAD_OFF + lengths[i] + pad_ri, chans[i]),
                                  jnp.float32))
    prepool_blocks = tuple(i for i in range(len(ks))
                           if (lengths[i] // 2) % 8 != 0)
    for i in prepool_blocks:
        scratch.append(pltpu.VMEM((B * lengths[i], chans[i + 1]), jnp.float32))

    kern = functools.partial(fused_cnn_kernel, ksizes=tuple(ks), pool_size=P,
                             act_name=config["act_fn"],
                             prepool_blocks=prepool_blocks)
    out_pad = pl.pallas_call(
        kern,
        out_shape=jax.ShapeDtypeStruct((B, kp["out_lanes"]), jnp.float32),
        in_specs=[_VMEM] * 8,
        out_specs=_VMEM,
        scratch_shapes=scratch,
    )(x_pad, kp["w0"], kp["w1"], kp["w2"],
      kp["wf1p"], kp["wf2"], kp["wf3p"], kp["pk"])
    return out_pad[:, :NC]


# ----------------------------------------------------------------------------
# Pure-JAX reference (PyTorch NCL layout, f32) for a sanity check
# ----------------------------------------------------------------------------
def reference_forward(x, params, config):
    act = config["act_fn"]
    h = jnp.pad(x, ((0, 0), (0, 0), (1, 0)))              # F.pad(x, (1, 0))
    for (w, scale, shift), _k in zip(params["conv"], config["conv_kernel_sizes"]):
        w_oik = jnp.transpose(w, (2, 1, 0))               # (Cout, Cin, K)
        y = lax.conv_general_dilated(
            h, w_oik, window_strides=(1,), padding="SAME",
            dimension_numbers=("NCH", "OIH", "NCH"))
        y = y * scale.reshape(1, -1, 1) + shift.reshape(1, -1, 1)
        y = _act(y, act)
        B, C, L = y.shape
        h = y.reshape(B, C, L // 2, 2).max(axis=-1)       # MaxPool1d(2, 2)
    P = config["adaptive_pool_size"]
    B, C, L = h.shape
    hp = h.reshape(B, C, P, L // P).mean(axis=-1)         # AdaptiveAvgPool1d(P)
    flat = hp.reshape(B, C * P)                           # torch Flatten (c-major)
    z1 = _act(flat @ params["w1_t"].T * params["s1"][0] + params["t1"][0], act)
    z2 = _act(z1 @ params["w2"] * params["s2"][0] + params["t2"][0], act)
    return z2 @ params["w3"] + params["b3"]


# ----------------------------------------------------------------------------
# Deterministic parameter init (inference-mode BN folded into scale/shift)
# ----------------------------------------------------------------------------
def init_params(key, config):
    ch = config["ch_nums"]
    ks = config["conv_kernel_sizes"]
    P = config["adaptive_pool_size"]
    F0, F1 = config["fully_connected_layer"]
    NC = config["num_classes"]
    keys = iter(jax.random.split(key, 64))

    def nrm(shape, s=1.0):
        return s * jax.random.normal(next(keys), shape, jnp.float32)

    def bn_fold(bias, cdim):
        gamma = 1.0 + 0.1 * nrm((cdim,))
        beta = 0.1 * nrm((cdim,))
        rmean = 0.1 * nrm((cdim,))
        rvar = 1.0 + 0.5 * jax.random.uniform(next(keys), (cdim,), jnp.float32)
        scale = gamma / jnp.sqrt(rvar + EPS)
        shift = (bias - rmean) * scale + beta
        return scale, shift

    params = {"conv": []}
    for i in range(len(ks)):
        cin, cout, k = ch[i], ch[i + 1], ks[i]
        w = nrm((k, cin, cout), 1.0 / (cin * k) ** 0.5)   # (K, Cin, Cout)
        b = 0.1 * nrm((cout,))
        scale, shift = bn_fold(b, cout)
        params["conv"].append((w, scale.reshape(1, cout), shift.reshape(1, cout)))

    C3 = ch[-1]
    # FC1: torch weight (F0, C3*P); Flatten column index = c*P + p.
    w1_t = nrm((F0, C3 * P), 1.0 / (C3 * P) ** 0.5)
    b1 = 0.1 * nrm((F0,))
    s1, t1 = bn_fold(b1, F0)
    params["w1_t"] = w1_t
    params["w1p"] = jnp.transpose(w1_t.reshape(F0, C3, P), (2, 1, 0))  # (P,C3,F0)
    params["s1"] = s1.reshape(1, F0)
    params["t1"] = t1.reshape(1, F0)

    w2_t = nrm((F1, F0), 1.0 / F0 ** 0.5)
    b2 = 0.1 * nrm((F1,))
    s2, t2 = bn_fold(b2, F1)
    params["w2"] = w2_t.T
    params["s2"] = s2.reshape(1, F1)
    params["t2"] = t2.reshape(1, F1)

    w3_t = nrm((NC, F1), 1.0 / F1 ** 0.5)
    b3 = 0.1 * nrm((NC,))
    params["w3"] = w3_t.T
    params["b3"] = b3.reshape(1, NC)
    return params


def pack_kernel_params(params, config):
    """Fold BN scales into weights, cast matmul weights to bf16 and pack the
    remaining per-channel vectors into one (6, 128) array."""
    NC = config["num_classes"]
    out_lanes = max(128, ((NC + 127) // 128) * 128)
    kp = {"out_lanes": out_lanes}
    for i, (w, scale, _shift) in enumerate(params["conv"]):
        kp[f"w{i}"] = (w * scale.reshape(1, 1, -1)).astype(jnp.bfloat16)
    kp["wf1p"] = (params["w1p"] * params["s1"].reshape(1, 1, -1)).astype(jnp.bfloat16)
    kp["wf2"] = (params["w2"] * params["s2"]).astype(jnp.bfloat16)
    F1 = params["w3"].shape[0]
    wf3p = jnp.zeros((F1, out_lanes), jnp.float32).at[:, :NC].set(params["w3"])
    kp["wf3p"] = wf3p.astype(jnp.bfloat16)
    vecs = [params["conv"][0][2], params["conv"][1][2], params["conv"][2][2],
            params["t1"], params["t2"], params["b3"]]
    pk = jnp.zeros((len(vecs), out_lanes), jnp.float32)
    for r, v in enumerate(vecs):
        pk = pk.at[r, :v.shape[-1]].set(v.reshape(-1))
    kp["pk"] = pk
    return kp


if __name__ == "__main__":
    key = jax.random.PRNGKey(0)
    pkey, xkey = jax.random.split(key)
    params = init_params(pkey, CONFIG)
    kparams = pack_kernel_params(params, CONFIG)

    B, C0, Lraw = 2, CONFIG["ch_nums"][0], 31   # F.pad(...,(1,0)) -> length 32
    x = jax.random.normal(xkey, (B, C0, Lraw), jnp.float32)

    fwd = jax.jit(lambda xx: pallas_forward(xx, kparams, CONFIG))
    out = jax.block_until_ready(fwd(x))

    ref = reference_forward(x, params, CONFIG)
    assert out.shape == (B, CONFIG["num_classes"])
    # bf16 matmul operands (f32 accumulation) vs the f32 reference -> loose tol.
    if not jnp.allclose(out, ref, atol=1e-1, rtol=1e-1):
        raise AssertionError(
            "mismatch vs reference (max abs diff "
            f"{jnp.max(jnp.abs(out - ref)):.3e}):\n{out}\n{ref}")
    print("KERNEL_OK")
</pallas_src>

<mosaic_0001>
module attributes {stable_mosaic.version = 11 : i64} {
  func.func @fused_cnn_kernel(%arg0: memref<2x34x4xf32, #tpu.memory_space<vmem>>, %arg1: memref<3x4x8xbf16, #tpu.memory_space<vmem>>, %arg2: memref<3x8x16xbf16, #tpu.memory_space<vmem>>, %arg3: memref<3x16x32xbf16, #tpu.memory_space<vmem>>, %arg4: memref<2x32x32xbf16, #tpu.memory_space<vmem>>, %arg5: memref<32x16xbf16, #tpu.memory_space<vmem>>, %arg6: memref<16x128xbf16, #tpu.memory_space<vmem>>, %arg7: memref<6x128xf32, #tpu.memory_space<vmem>>, %arg8: memref<2x128xf32, #tpu.memory_space<vmem>>, %arg9: memref<2x25x8xf32, #tpu.memory_space<vmem>>, %arg10: memref<2x17x16xf32, #tpu.memory_space<vmem>>, %arg11: memref<16x32xf32, #tpu.memory_space<vmem>>) attributes {dimension_semantics = [], scalar_prefetch = 0 : i64, scratch_operands = 3 : i64, tpu.core_type = #tpu.core_type<tc>} {
    %c0 = arith.constant 0 : index
    %c0_0 = arith.constant 0 : index
    %0 = vector.load %arg7[%c0, %c0_0] : memref<6x128xf32, #tpu.memory_space<vmem>>, vector<1x8xf32>
    %cst = arith.constant 0.000000e+00 : f32
    %1 = vector.broadcast %cst : f32 to vector<32x8xf32>
    %c0_1 = arith.constant 0 : index
    %c0_2 = arith.constant 0 : index
    %c0_3 = arith.constant 0 : index
    %2 = tpu.strided_load %arg0[%c0_1, %c0_2, %c0_3] {strides = array<i32: 1, 2, 1>} : memref<2x34x4xf32, #tpu.memory_space<vmem>>, vector<2x16x4xf32>
    %3 = vector.shape_cast %2 : vector<2x16x4xf32> to vector<32x4xf32>
    %4 = arith.truncf %3 : vector<32x4xf32> to vector<32x4xbf16>
    %c0_4 = arith.constant 0 : index
    %c0_5 = arith.constant 0 : index
    %c0_6 = arith.constant 0 : index
    %5 = vector.load %arg1[%c0_4, %c0_5, %c0_6] : memref<3x4x8xbf16, #tpu.memory_space<vmem>>, vector<1x4x8xbf16>
    %6 = vector.shape_cast %5 : vector<1x4x8xbf16> to vector<4x8xbf16>
    %cst_7 = arith.constant dense<0.000000e+00> : vector<32x8xf32>
    %7 = tpu.matmul %4, %6, %cst_7 {dimension_numbers = #tpu.dot_dimension_numbers<[1], [0], [0], [1], [0, 0, 1, 1], [], []>} : vector<32x4xbf16>, vector<4x8xbf16>, vector<32x8xf32> -> vector<32x8xf32>
    %8 = arith.addf %1, %7 : vector<32x8xf32>
    %c0_8 = arith.constant 0 : index
    %c1 = arith.constant 1 : index
    %c0_9 = arith.constant 0 : index
    %9 = tpu.strided_load %arg0[%c0_8, %c1, %c0_9] {strides = array<i32: 1, 2, 1>} : memref<2x34x4xf32, #tpu.memory_space<vmem>>, vector<2x16x4xf32>
    %10 = vector.shape_cast %9 : vector<2x16x4xf32> to vector<32x4xf32>
    %11 = arith.truncf %10 : vector<32x4xf32> to vector<32x4xbf16>
    %c1_10 = arith.constant 1 : index
    %c0_11 = arith.constant 0 : index
    %c0_12 = arith.constant 0 : index
    %12 = vector.load %arg1[%c1_10, %c0_11, %c0_12] : memref<3x4x8xbf16, #tpu.memory_space<vmem>>, vector<1x4x8xbf16>
    %13 = vector.shape_cast %12 : vector<1x4x8xbf16> to vector<4x8xbf16>
    %cst_13 = arith.constant dense<0.000000e+00> : vector<32x8xf32>
    %14 = tpu.matmul %11, %13, %cst_13 {dimension_numbers = #tpu.dot_dimension_numbers<[1], [0], [0], [1], [0, 0, 1, 1], [], []>} : vector<32x4xbf16>, vector<4x8xbf16>, vector<32x8xf32> -> vector<32x8xf32>
    %15 = arith.addf %8, %14 : vector<32x8xf32>
    %c0_14 = arith.constant 0 : index
    %c2 = arith.constant 2 : index
    %c0_15 = arith.constant 0 : index
    %16 = tpu.strided_load %arg0[%c0_14, %c2, %c0_15] {strides = array<i32: 1, 2, 1>} : memref<2x34x4xf32, #tpu.memory_space<vmem>>, vector<2x16x4xf32>
    %17 = vector.shape_cast %16 : vector<2x16x4xf32> to vector<32x4xf32>
    %18 = arith.truncf %17 : vector<32x4xf32> to vector<32x4xbf16>
    %c2_16 = arith.constant 2 : index
    %c0_17 = arith.constant 0 : index
    %c0_18 = arith.constant 0 : index
    %19 = vector.load %arg1[%c2_16, %c0_17, %c0_18] : memref<3x4x8xbf16, #tpu.memory_space<vmem>>, vector<1x4x8xbf16>
    %20 = vector.shape_cast %19 : vector<1x4x8xbf16> to vector<4x8xbf16>
    %cst_19 = arith.constant dense<0.000000e+00> : vector<32x8xf32>
    %21 = tpu.matmul %18, %20, %cst_19 {dimension_numbers = #tpu.dot_dimension_numbers<[1], [0], [0], [1], [0, 0, 1, 1], [], []>} : vector<32x4xbf16>, vector<4x8xbf16>, vector<32x8xf32> -> vector<32x8xf32>
    %22 = arith.addf %15, %21 : vector<32x8xf32>
    %cst_20 = arith.constant 0.000000e+00 : f32
    %23 = vector.broadcast %cst_20 : f32 to vector<32x8xf32>
    %c0_21 = arith.constant 0 : index
    %c1_22 = arith.constant 1 : index
    %c0_23 = arith.constant 0 : index
    %24 = tpu.strided_load %arg0[%c0_21, %c1_22, %c0_23] {strides = array<i32: 1, 2, 1>} : memref<2x34x4xf32, #tpu.memory_space<vmem>>, vector<2x16x4xf32>
    %25 = vector.shape_cast %24 : vector<2x16x4xf32> to vector<32x4xf32>
    %26 = arith.truncf %25 : vector<32x4xf32> to vector<32x4xbf16>
    %c0_24 = arith.constant 0 : index
    %c0_25 = arith.constant 0 : index
    %c0_26 = arith.constant 0 : index
    %27 = vector.load %arg1[%c0_24, %c0_25, %c0_26] : memref<3x4x8xbf16, #tpu.memory_space<vmem>>, vector<1x4x8xbf16>
    %28 = vector.shape_cast %27 : vector<1x4x8xbf16> to vector<4x8xbf16>
    %cst_27 = arith.constant dense<0.000000e+00> : vector<32x8xf32>
    %29 = tpu.matmul %26, %28, %cst_27 {dimension_numbers = #tpu.dot_dimension_numbers<[1], [0], [0], [1], [0, 0, 1, 1], [], []>} : vector<32x4xbf16>, vector<4x8xbf16>, vector<32x8xf32> -> vector<32x8xf32>
    %30 = arith.addf %23, %29 : vector<32x8xf32>
    %c0_28 = arith.constant 0 : index
    %c2_29 = arith.constant 2 : index
    %c0_30 = arith.constant 0 : index
    %31 = tpu.strided_load %arg0[%c0_28, %c2_29, %c0_30] {strides = array<i32: 1, 2, 1>} : memref<2x34x4xf32, #tpu.memory_space<vmem>>, vector<2x16x4xf32>
    %32 = vector.shape_cast %31 : vector<2x16x4xf32> to vector<32x4xf32>
    %33 = arith.truncf %32 : vector<32x4xf32> to vector<32x4xbf16>
    %c1_31 = arith.constant 1 : index
    %c0_32 = arith.constant 0 : index
    %c0_33 = arith.constant 0 : index
    %34 = vector.load %arg1[%c1_31, %c0_32, %c0_33] : memref<3x4x8xbf16, #tpu.memory_space<vmem>>, vector<1x4x8xbf16>
    %35 = vector.shape_cast %34 : vector<1x4x8xbf16> to vector<4x8xbf16>
    %cst_34 = arith.constant dense<0.000000e+00> : vector<32x8xf32>
    %36 = tpu.matmul %33, %35, %cst_34 {dimension_numbers = #tpu.dot_dimension_numbers<[1], [0], [0], [1], [0, 0, 1, 1], [], []>} : vector<32x4xbf16>, vector<4x8xbf16>, vector<32x8xf32> -> vector<32x8xf32>
    %37 = arith.addf %30, %36 : vector<32x8xf32>
    %c0_35 = arith.constant 0 : index
    %c3 = arith.constant 3 : index
    %c0_36 = arith.constant 0 : index
    %38 = tpu.strided_load %arg0[%c0_35, %c3, %c0_36] {strides = array<i32: 1, 2, 1>} : memref<2x34x4xf32, #tpu.memory_space<vmem>>, vector<2x16x4xf32>
    %39 = vector.shape_cast %38 : vector<2x16x4xf32> to vector<32x4xf32>
    %40 = arith.truncf %39 : vector<32x4xf32> to vector<32x4xbf16>
    %c2_37 = arith.constant 2 : index
    %c0_38 = arith.constant 0 : index
    %c0_39 = arith.constant 0 : index
    %41 = vector.load %arg1[%c2_37, %c0_38, %c0_39] : memref<3x4x8xbf16, #tpu.memory_space<vmem>>, vector<1x4x8xbf16>
    %42 = vector.shape_cast %41 : vector<1x4x8xbf16> to vector<4x8xbf16>
    %cst_40 = arith.constant dense<0.000000e+00> : vector<32x8xf32>
    %43 = tpu.matmul %40, %42, %cst_40 {dimension_numbers = #tpu.dot_dimension_numbers<[1], [0], [0], [1], [0, 0, 1, 1], [], []>} : vector<32x4xbf16>, vector<4x8xbf16>, vector<32x8xf32> -> vector<32x8xf32>
    %44 = arith.addf %37, %43 : vector<32x8xf32>
    %45 = vector.broadcast %0 : vector<1x8xf32> to vector<32x8xf32>
    %46 = arith.addf %22, %45 : vector<32x8xf32>
    %cst_41 = arith.constant 0.000000e+00 : f32
    %47 = vector.broadcast %cst_41 : f32 to vector<32x8xf32>
    %48 = arith.maximumf %46, %47 : vector<32x8xf32>
    %49 = vector.broadcast %0 : vector<1x8xf32> to vector<32x8xf32>
    %50 = arith.addf %44, %49 : vector<32x8xf32>
    %cst_42 = arith.constant 0.000000e+00 : f32
    %51 = vector.broadcast %cst_42 : f32 to vector<32x8xf32>
    %52 = arith.maximumf %50, %51 : vector<32x8xf32>
    %53 = arith.maximumf %48, %52 : vector<32x8xf32>
    %c1_43 = arith.constant 1 : index
    %c0_44 = arith.constant 0 : index
    %54 = vector.load %arg7[%c1_43, %c0_44] : memref<6x128xf32, #tpu.memory_space<vmem>>, vector<1x16xf32>
    %cst_45 = arith.constant 0.000000e+00 : f32
    %55 = vector.broadcast %cst_45 : f32 to vector<2x1x8xf32>
    %c0_46 = arith.constant 0 : index
    %c7 = arith.constant 7 : index
    %c0_47 = arith.constant 0 : index
    %56 = vector.load %arg9[%c0_46, %c7, %c0_47] : memref<2x25x8xf32, #tpu.memory_space<vmem>>, vector<2x1x8xf32>
    tpu.vector_store %arg9[%c0_46, %c7, %c0_47], %55 {strides = array<i32>} : memref<2x25x8xf32, #tpu.memory_space<vmem>>, vector<2x1x8xf32>,
    %cst_48 = arith.constant 0.000000e+00 : f32
    %57 = vector.broadcast %cst_48 : f32 to vector<2x1x8xf32>
    %c0_49 = arith.constant 0 : index
    %c24 = arith.constant 24 : index
    %c0_50 = arith.constant 0 : index
    %58 = vector.load %arg9[%c0_49, %c24, %c0_50] : memref<2x25x8xf32, #tpu.memory_space<vmem>>, vector<2x1x8xf32>
    tpu.vector_store %arg9[%c0_49, %c24, %c0_50], %57 {strides = array<i32>} : memref<2x25x8xf32, #tpu.memory_space<vmem>>, vector<2x1x8xf32>,
    %59 = vector.shape_cast %53 : vector<32x8xf32> to vector<2x16x8xf32>
    %c0_51 = arith.constant 0 : index
    %c8 = arith.constant 8 : index
    %c0_52 = arith.constant 0 : index
    %60 = vector.load %arg9[%c0_51, %c8, %c0_52] : memref<2x25x8xf32, #tpu.memory_space<vmem>>, vector<2x16x8xf32>
    tpu.vector_store %arg9[%c0_51, %c8, %c0_52], %59 {strides = array<i32>} : memref<2x25x8xf32, #tpu.memory_space<vmem>>, vector<2x16x8xf32>,
    %cst_53 = arith.constant 0.000000e+00 : f32
    %61 = vector.broadcast %cst_53 : f32 to vector<16x16xf32>
    %c0_54 = arith.constant 0 : index
    %c7_55 = arith.constant 7 : index
    %c0_56 = arith.constant 0 : index
    %62 = tpu.strided_load %arg9[%c0_54, %c7_55, %c0_56] {strides = array<i32: 1, 2, 1>} : memref<2x25x8xf32, #tpu.memory_space<vmem>>, vector<2x8x8xf32>
    %63 = vector.shape_cast %62 : vector<2x8x8xf32> to vector<16x8xf32>
    %64 = arith.truncf %63 : vector<16x8xf32> to vector<16x8xbf16>
    %c0_57 = arith.constant 0 : index
    %c0_58 = arith.constant 0 : index
    %c0_59 = arith.constant 0 : index
    %65 = vector.load %arg2[%c0_57, %c0_58, %c0_59] : memref<3x8x16xbf16, #tpu.memory_space<vmem>>, vector<1x8x16xbf16>
    %66 = vector.shape_cast %65 : vector<1x8x16xbf16> to vector<8x16xbf16>
    %cst_60 = arith.constant dense<0.000000e+00> : vector<16x16xf32>
    %67 = tpu.matmul %64, %66, %cst_60 {dimension_numbers = #tpu.dot_dimension_numbers<[1], [0], [0], [1], [0, 0, 1, 1], [], []>} : vector<16x8xbf16>, vector<8x16xbf16>, vector<16x16xf32> -> vector<16x16xf32>
    %68 = arith.addf %61, %67 : vector<16x16xf32>
    %c0_61 = arith.constant 0 : index
    %c8_62 = arith.constant 8 : index
    %c0_63 = arith.constant 0 : index
    %69 = tpu.strided_load %arg9[%c0_61, %c8_62, %c0_63] {strides = array<i32: 1, 2, 1>} : memref<2x25x8xf32, #tpu.memory_space<vmem>>, vector<2x8x8xf32>
    %70 = vector.shape_cast %69 : vector<2x8x8xf32> to vector<16x8xf32>
    %71 = arith.truncf %70 : vector<16x8xf32> to vector<16x8xbf16>
    %c1_64 = arith.constant 1 : index
    %c0_65 = arith.constant 0 : index
    %c0_66 = arith.constant 0 : index
    %72 = vector.load %arg2[%c1_64, %c0_65, %c0_66] : memref<3x8x16xbf16, #tpu.memory_space<vmem>>, vector<1x8x16xbf16>
    %73 = vector.shape_cast %72 : vector<1x8x16xbf16> to vector<8x16xbf16>
    %cst_67 = arith.constant dense<0.000000e+00> : vector<16x16xf32>
    %74 = tpu.matmul %71, %73, %cst_67 {dimension_numbers = #tpu.dot_dimension_numbers<[1], [0], [0], [1], [0, 0, 1, 1], [], []>} : vector<16x8xbf16>, vector<8x16xbf16>, vector<16x16xf32> -> vector<16x16xf32>
    %75 = arith.addf %68, %74 : vector<16x16xf32>
    %c0_68 = arith.constant 0 : index
    %c9 = arith.constant 9 : index
    %c0_69 = arith.constant 0 : index
    %76 = tpu.strided_load %arg9[%c0_68, %c9, %c0_69] {strides = array<i32: 1, 2, 1>} : memref<2x25x8xf32, #tpu.memory_space<vmem>>, vector<2x8x8xf32>
    %77 = vector.shape_cast %76 : vector<2x8x8xf32> to vector<16x8xf32>
    %78 = arith.truncf %77 : vector<16x8xf32> to vector<16x8xbf16>
    %c2_70 = arith.constant 2 : index
    %c0_71 = arith.constant 0 : index
    %c0_72 = arith.constant 0 : index
    %79 = vector.load %arg2[%c2_70, %c0_71, %c0_72] : memref<3x8x16xbf16, #tpu.memory_space<vmem>>, vector<1x8x16xbf16>
    %80 = vector.shape_cast %79 : vector<1x8x16xbf16> to vector<8x16xbf16>
    %cst_73 = arith.constant dense<0.000000e+00> : vector<16x16xf32>
    %81 = tpu.matmul %78, %80, %cst_73 {dimension_numbers = #tpu.dot_dimension_numbers<[1], [0], [0], [1], [0, 0, 1, 1], [], []>} : vector<16x8xbf16>, vector<8x16xbf16>, vector<16x16xf32> -> vector<16x16xf32>
    %82 = arith.addf %75, %81 : vector<16x16xf32>
    %cst_74 = arith.constant 0.000000e+00 : f32
    %83 = vector.broadcast %cst_74 : f32 to vector<16x16xf32>
    %c0_75 = arith.constant 0 : index
    %c8_76 = arith.constant 8 : index
    %c0_77 = arith.constant 0 : index
    %84 = tpu.strided_load %arg9[%c0_75, %c8_76, %c0_77] {strides = array<i32: 1, 2, 1>} : memref<2x25x8xf32, #tpu.memory_space<vmem>>, vector<2x8x8xf32>
    %85 = vector.shape_cast %84 : vector<2x8x8xf32> to vector<16x8xf32>
    %86 = arith.truncf %85 : vector<16x8xf32> to vector<16x8xbf16>
    %c0_78 = arith.constant 0 : index
    %c0_79 = arith.constant 0 : index
    %c0_80 = arith.constant 0 : index
    %87 = vector.load %arg2[%c0_78, %c0_79, %c0_80] : memref<3x8x16xbf16, #tpu.memory_space<vmem>>, vector<1x8x16xbf16>
    %88 = vector.shape_cast %87 : vector<1x8x16xbf16> to vector<8x16xbf16>
    %cst_81 = arith.constant dense<0.000000e+00> : vector<16x16xf32>
    %89 = tpu.matmul %86, %88, %cst_81 {dimension_numbers = #tpu.dot_dimension_numbers<[1], [0], [0], [1], [0, 0, 1, 1], [], []>} : vector<16x8xbf16>, vector<8x16xbf16>, vector<16x16xf32> -> vector<16x16xf32>
    %90 = arith.addf %83, %89 : vector<16x16xf32>
    %c0_82 = arith.constant 0 : index
    %c9_83 = arith.constant 9 : index
    %c0_84 = arith.constant 0 : index
    %91 = tpu.strided_load %arg9[%c0_82, %c9_83, %c0_84] {strides = array<i32: 1, 2, 1>} : memref<2x25x8xf32, #tpu.memory_space<vmem>>, vector<2x8x8xf32>
    %92 = vector.shape_cast %91 : vector<2x8x8xf32> to vector<16x8xf32>
    %93 = arith.truncf %92 : vector<16x8xf32> to vector<16x8xbf16>
    %c1_85 = arith.constant 1 : index
    %c0_86 = arith.constant 0 : index
    %c0_87 = arith.constant 0 : index
    %94 = vector.load %arg2[%c1_85, %c0_86, %c0_87] : memref<3x8x16xbf16, #tpu.memory_space<vmem>>, vector<1x8x16xbf16>
    %95 = vector.shape_cast %94 : vector<1x8x16xbf16> to vector<8x16xbf16>
    %cst_88 = arith.constant dense<0.000000e+00> : vector<16x16xf32>
    %96 = tpu.matmul %93, %95, %cst_88 {dimension_numbers = #tpu.dot_dimension_numbers<[1], [0], [0], [1], [0, 0, 1, 1], [], []>} : vector<16x8xbf16>, vector<8x16xbf16>, vector<16x16xf32> -> vector<16x16xf32>
    %97 = arith.addf %90, %96 : vector<16x16xf32>
    %c0_89 = arith.constant 0 : index
    %c10 = arith.constant 10 : index
    %c0_90 = arith.constant 0 : index
    %98 = tpu.strided_load %arg9[%c0_89, %c10, %c0_90] {strides = array<i32: 1, 2, 1>} : memref<2x25x8xf32, #tpu.memory_space<vmem>>, vector<2x8x8xf32>
    %99 = vector.shape_cast %98 : vector<2x8x8xf32> to vector<16x8xf32>
    %100 = arith.truncf %99 : vector<16x8xf32> to vector<16x8xbf16>
    %c2_91 = arith.constant 2 : index
    %c0_92 = arith.constant 0 : index
    %c0_93 = arith.constant 0 : index
    %101 = vector.load %arg2[%c2_91, %c0_92, %c0_93] : memref<3x8x16xbf16, #tpu.memory_space<vmem>>, vector<1x8x16xbf16>
    %102 = vector.shape_cast %101 : vector<1x8x16xbf16> to vector<8x16xbf16>
    %cst_94 = arith.constant dense<0.000000e+00> : vector<16x16xf32>
    %103 = tpu.matmul %100, %102, %cst_94 {dimension_numbers = #tpu.dot_dimension_numbers<[1], [0], [0], [1], [0, 0, 1, 1], [], []>} : vector<16x8xbf16>, vector<8x16xbf16>, vector<16x16xf32> -> vector<16x16xf32>
    %104 = arith.addf %97, %103 : vector<16x16xf32>
    %105 = vector.broadcast %54 : vector<1x16xf32> to vector<16x16xf32>
    %106 = arith.addf %82, %105 : vector<16x16xf32>
    %cst_95 = arith.constant 0.000000e+00 : f32
    %107 = vector.broadcast %cst_95 : f32 to vector<16x16xf32>
    %108 = arith.maximumf %106, %107 : vector<16x16xf32>
    %109 = vector.broadcast %54 : vector<1x16xf32> to vector<16x16xf32>
    %110 = arith.addf %104, %109 : vector<16x16xf32>
    %cst_96 = arith.constant 0.000000e+00 : f32
    %111 = vector.broadcast %cst_96 : f32 to vector<16x16xf32>
    %112 = arith.maximumf %110, %111 : vector<16x16xf32>
    %113 = arith.maximumf %108, %112 : vector<16x16xf32>
    %c2_97 = arith.constant 2 : index
    %c0_98 = arith.constant 0 : index
    %114 = vector.load %arg7[%c2_97, %c0_98] : memref<6x128xf32, #tpu.memory_space<vmem>>, vector<1x32xf32>
    %cst_99 = arith.constant 0.000000e+00 : f32
    %115 = vector.broadcast %cst_99 : f32 to vector<2x1x16xf32>
    %c0_100 = arith.constant 0 : index
    %c7_101 = arith.constant 7 : index
    %c0_102 = arith.constant 0 : index
    %116 = vector.load %arg10[%c0_100, %c7_101, %c0_102] : memref<2x17x16xf32, #tpu.memory_space<vmem>>, vector<2x1x16xf32>
    tpu.vector_store %arg10[%c0_100, %c7_101, %c0_102], %115 {strides = array<i32>} : memref<2x17x16xf32, #tpu.memory_space<vmem>>, vector<2x1x16xf32>,
    %cst_103 = arith.constant 0.000000e+00 : f32
    %117 = vector.broadcast %cst_103 : f32 to vector<2x1x16xf32>
    %c0_104 = arith.constant 0 : index
    %c16 = arith.constant 16 : index
    %c0_105 = arith.constant 0 : index
    %118 = vector.load %arg10[%c0_104, %c16, %c0_105] : memref<2x17x16xf32, #tpu.memory_space<vmem>>, vector<2x1x16xf32>
    tpu.vector_store %arg10[%c0_104, %c16, %c0_105], %117 {strides = array<i32>} : memref<2x17x16xf32, #tpu.memory_space<vmem>>, vector<2x1x16xf32>,
    %119 = vector.shape_cast %113 : vector<16x16xf32> to vector<2x8x16xf32>
    %c0_106 = arith.constant 0 : index
    %c8_107 = arith.constant 8 : index
    %c0_108 = arith.constant 0 : index
    %120 = vector.load %arg10[%c0_106, %c8_107, %c0_108] : memref<2x17x16xf32, #tpu.memory_space<vmem>>, vector<2x8x16xf32>
    tpu.vector_store %arg10[%c0_106, %c8_107, %c0_108], %119 {strides = array<i32>} : memref<2x17x16xf32, #tpu.memory_space<vmem>>, vector<2x8x16xf32>,
    %cst_109 = arith.constant 0.000000e+00 : f32
    %121 = vector.broadcast %cst_109 : f32 to vector<16x32xf32>
    %c0_110 = arith.constant 0 : index
    %c7_111 = arith.constant 7 : index
    %c0_112 = arith.constant 0 : index
    %122 = vector.load %arg10[%c0_110, %c7_111, %c0_112] : memref<2x17x16xf32, #tpu.memory_space<vmem>>, vector<2x8x16xf32>
    %123 = vector.shape_cast %122 : vector<2x8x16xf32> to vector<16x16xf32>
    %124 = arith.truncf %123 : vector<16x16xf32> to vector<16x16xbf16>
    %c0_113 = arith.constant 0 : index
    %c0_114 = arith.constant 0 : index
    %c0_115 = arith.constant 0 : index
    %125 = vector.load %arg3[%c0_113, %c0_114, %c0_115] : memref<3x16x32xbf16, #tpu.memory_space<vmem>>, vector<1x16x32xbf16>
    %126 = vector.shape_cast %125 : vector<1x16x32xbf16> to vector<16x32xbf16>
    %cst_116 = arith.constant dense<0.000000e+00> : vector<16x32xf32>
    %127 = tpu.matmul %124, %126, %cst_116 {dimension_numbers = #tpu.dot_dimension_numbers<[1], [0], [0], [1], [0, 0, 1, 1], [], []>} : vector<16x16xbf16>, vector<16x32xbf16>, vector<16x32xf32> -> vector<16x32xf32>
    %128 = arith.addf %121, %127 : vector<16x32xf32>
    %c0_117 = arith.constant 0 : index
    %c8_118 = arith.constant 8 : index
    %c0_119 = arith.constant 0 : index
    %129 = vector.load %arg10[%c0_117, %c8_118, %c0_119] : memref<2x17x16xf32, #tpu.memory_space<vmem>>, vector<2x8x16xf32>
    %130 = vector.shape_cast %129 : vector<2x8x16xf32> to vector<16x16xf32>
    %131 = arith.truncf %130 : vector<16x16xf32> to vector<16x16xbf16>
    %c1_120 = arith.constant 1 : index
    %c0_121 = arith.constant 0 : index
    %c0_122 = arith.constant 0 : index
    %132 = vector.load %arg3[%c1_120, %c0_121, %c0_122] : memref<3x16x32xbf16, #tpu.memory_space<vmem>>, vector<1x16x32xbf16>
    %133 = vector.shape_cast %132 : vector<1x16x32xbf16> to vector<16x32xbf16>
    %cst_123 = arith.constant dense<0.000000e+00> : vector<16x32xf32>
    %134 = tpu.matmul %131, %133, %cst_123 {dimension_numbers = #tpu.dot_dimension_numbers<[1], [0], [0], [1], [0, 0, 1, 1], [], []>} : vector<16x16xbf16>, vector<16x32xbf16>, vector<16x32xf32> -> vector<16x32xf32>
    %135 = arith.addf %128, %134 : vector<16x32xf32>
    %c0_124 = arith.constant 0 : index
    %c9_125 = arith.constant 9 : index
    %c0_126 = arith.constant 0 : index
    %136 = vector.load %arg10[%c0_124, %c9_125, %c0_126] : memref<2x17x16xf32, #tpu.memory_space<vmem>>, vector<2x8x16xf32>
    %137 = vector.shape_cast %136 : vector<2x8x16xf32> to vector<16x16xf32>
    %138 = arith.truncf %137 : vector<16x16xf32> to vector<16x16xbf16>
    %c2_127 = arith.constant 2 : index
    %c0_128 = arith.constant 0 : index
    %c0_129 = arith.constant 0 : index
    %139 = vector.load %arg3[%c2_127, %c0_128, %c0_129] : memref<3x16x32xbf16, #tpu.memory_space<vmem>>, vector<1x16x32xbf16>
    %140 = vector.shape_cast %139 : vector<1x16x32xbf16> to vector<16x32xbf16>
    %cst_130 = arith.constant dense<0.000000e+00> : vector<16x32xf32>
    %141 = tpu.matmul %138, %140, %cst_130 {dimension_numbers = #tpu.dot_dimension_numbers<[1], [0], [0], [1], [0, 0, 1, 1], [], []>} : vector<16x16xbf16>, vector<16x32xbf16>, vector<16x32xf32> -> vector<16x32xf32>
    %142 = arith.addf %135, %141 : vector<16x32xf32>
    %143 = vector.broadcast %114 : vector<1x32xf32> to vector<16x32xf32>
    %144 = arith.addf %142, %143 : vector<16x32xf32>
    %cst_131 = arith.constant 0.000000e+00 : f32
    %145 = vector.broadcast %cst_131 : f32 to vector<16x32xf32>
    %146 = arith.maximumf %144, %145 : vector<16x32xf32>
    %c0_132 = arith.constant 0 : index
    %c0_133 = arith.constant 0 : index
    %147 = vector.load %arg11[%c0_132, %c0_133] : memref<16x32xf32, #tpu.memory_space<vmem>>, vector<16x32xf32>
    tpu.vector_store %arg11[%c0_132, %c0_133], %146 {strides = array<i32>} : memref<16x32xf32, #tpu.memory_space<vmem>>, vector<16x32xf32>,
    %c0_134 = arith.constant 0 : index
    %c0_135 = arith.constant 0 : index
    %148 = tpu.strided_load %arg11[%c0_134, %c0_135] {strides = array<i32: 2, 1>} : memref<16x32xf32, #tpu.memory_space<vmem>>, vector<8x32xf32>
    %c1_136 = arith.constant 1 : index
    %c0_137 = arith.constant 0 : index
    %149 = tpu.strided_load %arg11[%c1_136, %c0_137] {strides = array<i32: 2, 1>} : memref<16x32xf32, #tpu.memory_space<vmem>>, vector<8x32xf32>
    %150 = arith.maximumf %148, %149 : vector<8x32xf32>
    %151 = tpu.iota {dimensions = array<i32: 0>} : vector<2x8xi32>
    %152 = tpu.iota {dimensions = array<i32: 1>} : vector<2x8xi32>
    %153 = arith.truncf %150 : vector<8x32xf32> to vector<8x32xbf16>
    %cst_138 = arith.constant 0.000000e+00 : f32
    %154 = vector.broadcast %cst_138 : f32 to vector<2x32xf32>
    %c4_i32 = arith.constant 4 : i32
    %155 = vector.broadcast %c4_i32 : i32 to vector<2x8xi32>
    %156 = arith.muli %151, %155 : vector<2x8xi32>
    %c0_i32 = arith.constant 0 : i32
    %157 = vector.broadcast %c0_i32 : i32 to vector<2x8xi32>
    %158 = arith.addi %156, %157 : vector<2x8xi32>
    %159 = arith.cmpi sge, %152, %158 : vector<2x8xi32>
    %c2_i32 = arith.constant 2 : i32
    %160 = vector.broadcast %c2_i32 : i32 to vector<2x8xi32>
    %161 = arith.addi %158, %160 : vector<2x8xi32>
    %162 = arith.cmpi slt, %152, %161 : vector<2x8xi32>
    %163 = arith.andi %159, %162 : vector<2x8xi1>
    %cst_139 = arith.constant 5.000000e-01 : f32
    %cst_140 = arith.constant 0.000000e+00 : f32
    %164 = vector.broadcast %cst_139 : f32 to vector<2x8xf32>
    %165 = vector.broadcast %cst_140 : f32 to vector<2x8xf32>
    %166 = arith.select %163, %164, %165 : vector<2x8xi1>, vector<2x8xf32>
    %167 = arith.truncf %166 : vector<2x8xf32> to vector<2x8xbf16>
    %cst_141 = arith.constant dense<0.000000e+00> : vector<2x32xf32>
    %168 = tpu.matmul %167, %153, %cst_141 {dimension_numbers = #tpu.dot_dimension_numbers<[1], [0], [0], [1], [0, 0, 1, 1], [], []>} : vector<2x8xbf16>, vector<8x32xbf16>, vector<2x32xf32> -> vector<2x32xf32>
    %169 = arith.truncf %168 : vector<2x32xf32> to vector<2x32xbf16>
    %c0_142 = arith.constant 0 : index
    %c0_143 = arith.constant 0 : index
    %c0_144 = arith.constant 0 : index
    %170 = vector.load %arg4[%c0_142, %c0_143, %c0_144] : memref<2x32x32xbf16, #tpu.memory_space<vmem>>, vector<1x32x32xbf16>
    %171 = vector.shape_cast %170 : vector<1x32x32xbf16> to vector<32x32xbf16>
    %cst_145 = arith.constant dense<0.000000e+00> : vector<2x32xf32>
    %172 = tpu.matmul %169, %171, %cst_145 {dimension_numbers = #tpu.dot_dimension_numbers<[1], [0], [0], [1], [0, 0, 1, 1], [], []>} : vector<2x32xbf16>, vector<32x32xbf16>, vector<2x32xf32> -> vector<2x32xf32>
    %173 = arith.addf %154, %172 : vector<2x32xf32>
    %c4_i32_146 = arith.constant 4 : i32
    %174 = vector.broadcast %c4_i32_146 : i32 to vector<2x8xi32>
    %175 = arith.muli %151, %174 : vector<2x8xi32>
    %c2_i32_147 = arith.constant 2 : i32
    %176 = vector.broadcast %c2_i32_147 : i32 to vector<2x8xi32>
    %177 = arith.addi %175, %176 : vector<2x8xi32>
    %178 = arith.cmpi sge, %152, %177 : vector<2x8xi32>
    %c2_i32_148 = arith.constant 2 : i32
    %179 = vector.broadcast %c2_i32_148 : i32 to vector<2x8xi32>
    %180 = arith.addi %177, %179 : vector<2x8xi32>
    %181 = arith.cmpi slt, %152, %180 : vector<2x8xi32>
    %182 = arith.andi %178, %181 : vector<2x8xi1>
    %cst_149 = arith.constant 5.000000e-01 : f32
    %cst_150 = arith.constant 0.000000e+00 : f32
    %183 = vector.broadcast %cst_149 : f32 to vector<2x8xf32>
    %184 = vector.broadcast %cst_150 : f32 to vector<2x8xf32>
    %185 = arith.select %182, %183, %184 : vector<2x8xi1>, vector<2x8xf32>
    %186 = arith.truncf %185 : vector<2x8xf32> to vector<2x8xbf16>
    %cst_151 = arith.constant dense<0.000000e+00> : vector<2x32xf32>
    %187 = tpu.matmul %186, %153, %cst_151 {dimension_numbers = #tpu.dot_dimension_numbers<[1], [0], [0], [1], [0, 0, 1, 1], [], []>} : vector<2x8xbf16>, vector<8x32xbf16>, vector<2x32xf32> -> vector<2x32xf32>
    %188 = arith.truncf %187 : vector<2x32xf32> to vector<2x32xbf16>
    %c1_152 = arith.constant 1 : index
    %c0_153 = arith.constant 0 : index
    %c0_154 = arith.constant 0 : index
    %189 = vector.load %arg4[%c1_152, %c0_153, %c0_154] : memref<2x32x32xbf16, #tpu.memory_space<vmem>>, vector<1x32x32xbf16>
    %190 = vector.shape_cast %189 : vector<1x32x32xbf16> to vector<32x32xbf16>
    %cst_155 = arith.constant dense<0.000000e+00> : vector<2x32xf32>
    %191 = tpu.matmul %188, %190, %cst_155 {dimension_numbers = #tpu.dot_dimension_numbers<[1], [0], [0], [1], [0, 0, 1, 1], [], []>} : vector<2x32xbf16>, vector<32x32xbf16>, vector<2x32xf32> -> vector<2x32xf32>
    %192 = arith.addf %173, %191 : vector<2x32xf32>
    %c3_156 = arith.constant 3 : index
    %c0_157 = arith.constant 0 : index
    %193 = vector.load %arg7[%c3_156, %c0_157] : memref<6x128xf32, #tpu.memory_space<vmem>>, vector<1x32xf32>
    %194 = vector.broadcast %193 : vector<1x32xf32> to vector<2x32xf32>
    %195 = arith.addf %192, %194 : vector<2x32xf32>
    %cst_158 = arith.constant 0.000000e+00 : f32
    %196 = vector.broadcast %cst_158 : f32 to vector<2x32xf32>
    %197 = arith.maximumf %195, %196 : vector<2x32xf32>
    %198 = arith.truncf %197 : vector<2x32xf32> to vector<2x32xbf16>
    %c0_159 = arith.constant 0 : index
    %c0_160 = arith.constant 0 : index
    %199 = vector.load %arg5[%c0_159, %c0_160] : memref<32x16xbf16, #tpu.memory_space<vmem>>, vector<32x16xbf16>
    %cst_161 = arith.constant dense<0.000000e+00> : vector<2x16xf32>
    %200 = tpu.matmul %198, %199, %cst_161 {dimension_numbers = #tpu.dot_dimension_numbers<[1], [0], [0], [1], [0, 0, 1, 1], [], []>} : vector<2x32xbf16>, vector<32x16xbf16>, vector<2x16xf32> -> vector<2x16xf32>
    %c4 = arith.constant 4 : index
    %c0_162 = arith.constant 0 : index
    %201 = vector.load %arg7[%c4, %c0_162] : memref<6x128xf32, #tpu.memory_space<vmem>>, vector<1x16xf32>
    %202 = vector.broadcast %201 : vector<1x16xf32> to vector<2x16xf32>
    %203 = arith.addf %200, %202 : vector<2x16xf32>
    %cst_163 = arith.constant 0.000000e+00 : f32
    %204 = vector.broadcast %cst_163 : f32 to vector<2x16xf32>
    %205 = arith.maximumf %203, %204 : vector<2x16xf32>
    %206 = arith.truncf %205 : vector<2x16xf32> to vector<2x16xbf16>
    %c0_164 = arith.constant 0 : index
    %c0_165 = arith.constant 0 : index
    %207 = vector.load %arg6[%c0_164, %c0_165] : memref<16x128xbf16, #tpu.memory_space<vmem>>, vector<16x128xbf16>
    %cst_166 = arith.constant dense<0.000000e+00> : vector<2x128xf32>
    %208 = tpu.matmul %206, %207, %cst_166 {dimension_numbers = #tpu.dot_dimension_numbers<[1], [0], [0], [1], [0, 0, 1, 1], [], []>} : vector<2x16xbf16>, vector<16x128xbf16>, vector<2x128xf32> -> vector<2x128xf32>
    %c5 = arith.constant 5 : index
    %c0_167 = arith.constant 0 : index
    %209 = vector.load %arg7[%c5, %c0_167] : memref<6x128xf32, #tpu.memory_space<vmem>>, vector<1x128xf32>
    %210 = vector.broadcast %209 : vector<1x128xf32> to vector<2x128xf32>
    %211 = arith.addf %208, %210 : vector<2x128xf32>
    %c0_168 = arith.constant 0 : index
    %c0_169 = arith.constant 0 : index
    %212 = vector.load %arg8[%c0_168, %c0_169] : memref<2x128xf32, #tpu.memory_space<vmem>>, vector<2x128xf32>
    tpu.vector_store %arg8[%c0_168, %c0_169], %211 {strides = array<i32>} : memref<2x128xf32, #tpu.memory_space<vmem>>, vector<2x128xf32>,
    return
  }
}

</mosaic_0001>

<llo_original>
// kernel: _lambda_.1
$region0: #{_lambda_.1}
  #allocation0 [shape = 'u32[]', space=smem, size = 0x4, offset = 0x4, fixed_abs, tag = 'smem constant byte address 0x4 - core index']
  #allocation1 [shape = 'u32[144,128]{1,0:T(1,128)}', space=vmem, size = 0x12000, scoped, tag = 'internal scratch']
  #allocation2 [shape = 'f32[2,25,8]{2,1,0:T(8,128)}', space=vmem, size = 0x8000, scoped, tag = 'scratch operand']
  #allocation3 [shape = 'f32[2,17,16]{2,1,0:T(8,128)}', space=vmem, size = 0x6000, scoped, tag = 'scratch operand']
  #allocation4 [shape = 'f32[16,32]{1,0:T(8,128)}', space=vmem, size = 0x2000, scoped, tag = 'scratch operand']
  %s0 = inlined_call_operand.vmem [shape: f32[2,34,4], index: 0, kind: input, shape index: {}]
  %s1 = inlined_call_operand.vmem [shape: bf16[3,4,8], index: 1, kind: input, shape index: {}]
  %s2 = inlined_call_operand.vmem [shape: bf16[3,8,16], index: 2, kind: input, shape index: {}]
  %s3 = inlined_call_operand.vmem [shape: bf16[3,16,32], index: 3, kind: input, shape index: {}]
  %s4 = inlined_call_operand.vmem [shape: bf16[2,32,32], index: 4, kind: input, shape index: {}]
  %s5 = inlined_call_operand.vmem [shape: bf16[32,16], index: 5, kind: input, shape index: {}]
  %s6 = inlined_call_operand.vmem [shape: bf16[16,128], index: 6, kind: input, shape index: {}]
  %s7 = inlined_call_operand.vmem [shape: f32[6,128], index: 7, kind: input, shape index: {}]
  %s8 = inlined_call_operand.hbm [shape: f32[2,128], index: 8, kind: output, shape index: {}]
  %s9 = sld [smem:[#allocation0]]
  $region42: #{_lambda_.1} parent=0
    _
  %s11 = ssub.s32 1, %s9
  %s12 = scalar_select 0, %s11, %s9
  $region1: #{_lambda_.1} parent=0
    #allocation5 [shape = 'u8[1024]{0}', space=vmem, size = 0x400, scoped, tag = 'output window, operand 0, single buffered']
    #allocation6 [shape = 's32[1]{0}', space=sflag, size = 0x4, scoped, tag = 'scoped memory for _lambda_.1']
    %13 = vsyncpa [#allocation6], 0
    // Predicated region
    $region2: #{_lambda_.1} parent=1 // pred_check
      _
    $region3: #{_lambda_.1} parent=1 // pred_check_branch
      %15 = sbr.rel (0) target = $region5
    $region4: #{_lambda_.1} parent=1 // pred_region
      _
    $region5: #{_lambda_.1} parent=1 // pred_fallthru
      _
    // Predicated region
    $region6: #{_lambda_.1} parent=1 // pred_check
      _
    $region7: #{_lambda_.1} parent=1 // pred_check_branch
      %17 = sbr.rel (0) target = $region9
    $region8: #{_lambda_.1} parent=1 // pred_region
      _
    $region9: #{_lambda_.1} parent=1 // pred_fallthru
      _
    // Predicated region
    $region10: #{_lambda_.1} parent=1 // pred_check
      _
    $region11: #{_lambda_.1} parent=1 // pred_check_branch
      %19 = sbr.rel (0) target = $region13
    $region12: #{_lambda_.1} parent=1 // pred_region
      _
    $region13: #{_lambda_.1} parent=1 // pred_fallthru
      _
    // Predicated region
    $region14: #{_lambda_.1} parent=1 // pred_check
      _
    $region15: #{_lambda_.1} parent=1 // pred_check_branch
      %21 = sbr.rel (0) target = $region17
    $region16: #{_lambda_.1} parent=1 // pred_region
      _
    $region17: #{_lambda_.1} parent=1 // pred_fallthru
      _
    // Predicated region
    $region18: #{_lambda_.1} parent=1 // pred_check
      _
    $region19: #{_lambda_.1} parent=1 // pred_check_branch
      %23 = sbr.rel (0) target = $region21
    $region20: #{_lambda_.1} parent=1 // pred_region
      _
    $region21: #{_lambda_.1} parent=1 // pred_fallthru
      _
    // Predicated region
    $region22: #{_lambda_.1} parent=1 // pred_check
      _
    $region23: #{_lambda_.1} parent=1 // pred_check_branch
      %25 = sbr.rel (0) target = $region25
    $region24: #{_lambda_.1} parent=1 // pred_region
      _
    $region25: #{_lambda_.1} parent=1 // pred_fallthru
      _
    // Predicated region
    $region26: #{_lambda_.1} parent=1 // pred_check
      _
    $region27: #{_lambda_.1} parent=1 // pred_check_branch
      %27 = sbr.rel (0) target = $region29
    $region28: #{_lambda_.1} parent=1 // pred_region
      _
    $region29: #{_lambda_.1} parent=1 // pred_fallthru
      _
    // Predicated region
    $region30: #{_lambda_.1} parent=1 // pred_check
      _
    $region31: #{_lambda_.1} parent=1 // pred_check_branch
      %29 = sbr.rel (0) target = $region33
    $region32: #{_lambda_.1} parent=1 // pred_region
      _
    $region33: #{_lambda_.1} parent=1 // pred_fallthru
      _
    %v31 = vld [vmem:[%s7] sm:$0x1]
    %v32 = vld [vmem:[%s0] ss:$2 sm:$0xff]
    %s33 = scalar_lea.vmem %s0, 16
    %v34 = vld [vmem:[%s33] ss:$2 sm:$0xff]
    %s35 = scalar_lea.vmem %s0, 40
    %v36 = vld [vmem:[%s35] ss:$2 sm:$0xff]
    %s37 = scalar_lea.vmem %s0, 56
    %v38 = vld [vmem:[%s37] ss:$2 sm:$0xff]
    %v39 = vpack.c.bf16 %v34, %v32
    %v40 = vpack.c.bf16 %v38, %v36
    %v41 = vld [vmem:[%s1] sm:$0x3]
    %s42 = scalar_lea.vmem %s0, 1
    %v43 = vld [vmem:[%s42] ss:$2 sm:$0xff]
    %s44 = scalar_lea.vmem %s0, 17
    %v45 = vld [vmem:[%s44] ss:$2 sm:$0xff]
    %s46 = scalar_lea.vmem %s0, 41
    %v47 = vld [vmem:[%s46] ss:$2 sm:$0xff]
    %s48 = scalar_lea.vmem %s0, 57
    %v49 = vld [vmem:[%s48] ss:$2 sm:$0xff]
    %v50 = vpack.c.bf16 %v45, %v43
    %v51 = vpack.c.bf16 %v49, %v47
    %s52 = scalar_lea.vmem %s1, 2
    %v53 = vld [vmem:[%s52] sm:$0x3]
    %vm54 = vcmask 31744
    %v56 = vsel %vm54, %v50, 0
    %v59 = vsel %vm54, %v51, 0
    %vm61 = vcmask 1041408
    %v63 = vsel %vm61, %v53, 0
    %65 = vmatprep.subr.bf16.mxu0 0
    %66 = vmatpush1.bf16.msra.mxu0 0
    %67 = vmatprep.subr.bf16.mxu0 0
    %68 = vmatpush1.bf16.msra.mxu0 0
    %69 = vmatprep.subr.bf16.mxu0 0
    %70 = vmatpush1.bf16.msra.mxu0 0
    %71 = vmatprep.subr.bf16.mxu0 0
    %72 = vmatpush1.bf16.msra.mxu0 0
    %73 = vmatprep.subr.bf16.mxu0 0
    %74 = vmatpush1.bf16.msra.mxu0 0
    %75 = vmatprep.subr.bf16.mxu0 0
    %76 = vmatpush1.bf16.msra.mxu0 0
    %77 = vmatprep.subr.bf16.mxu0 0
    %78 = vmatpush1.bf16.msra.mxu0 0
    %79 = vmatprep.subr.bf16.mxu0 0
    %80 = vmatpush1.bf16.msra.mxu0 %v63
    %81 = vmatprep.subr.bf16.mxu0 0
    %82 = vmatpush2.bf16.msra.mxu0 0
    %83 = vmatprep.subr.bf16.mxu0 0
    %84 = vmatpush2.bf16.msra.mxu0 0
    %85 = vmatprep.subr.bf16.mxu0 0
    %86 = vmatpush2.bf16.msra.mxu0 0
    %87 = vmatprep.subr.bf16.mxu0 0
    %88 = vmatpush2.bf16.msra.mxu0 0
    %89 = vmatprep.subr.bf16.mxu0 0
    %90 = vmatpush2.bf16.msra.mxu0 0
    %91 = vmatprep.subr.bf16.mxu0 0
    %92 = vmatpush2.bf16.msra.mxu0 0
    %93 = vmatprep.subr.bf16.mxu0 0
    %94 = vmatpush2.bf16.msra.mxu0 0
    %95 = vmatprep.subr.bf16.mxu0 0
    %96 = vmatpush2.bf16.msra.mxu0 0
    %97 = vmatprep.mubr.bf16.mxu0 0
    %98 = vmatmul.mubr.bf16.gmra.mxu0 %v56
    %v99 = vpop.f32.mrf.mxu0
    %v100 = vadd.f32 0.0, %v99
    %v101 = vpop.f32.mrf.mxu0
    %v102 = vpop.f32.mrf.mxu0
    %v103 = vadd.f32 0.0, %v102
    %v104 = vpop.f32.mrf.mxu0
    %105 = vmatprep.mubr.bf16.mxu0 0
    %106 = vmatmul.mubr.bf16.gmra.mxu0 %v59
    %v107 = vpop.f32.mrf.mxu0
    %v108 = vadd.f32 0.0, %v107
    %v109 = vpop.f32.mrf.mxu0
    %v110 = vpop.f32.mrf.mxu0
    %v111 = vadd.f32 0.0, %v110
    %v112 = vpop.f32.mrf.mxu0
    %113 = vdwg.mxu0
    %v115 = vsel %vm54, %v39, 0
    %v118 = vsel %vm54, %v40, 0
    %v121 = vsel %vm61, %v41, 0
    %123 = vmatprep.subr.bf16.mxu0 0
    %124 = vmatpush1.bf16.msra.mxu0 0
    %125 = vmatprep.subr.bf16.mxu0 0
    %126 = vmatpush1.bf16.msra.mxu0 0
    %127 = vmatprep.subr.bf16.mxu0 0
    %128 = vmatpush1.bf16.msra.mxu0 0
    %129 = vmatprep.subr.bf16.mxu0 0
    %130 = vmatpush1.bf16.msra.mxu0 0
    %131 = vmatprep.subr.bf16.mxu0 0
    %132 = vmatpush1.bf16.msra.mxu0 0
    %133 = vmatprep.subr.bf16.mxu0 0
    %134 = vmatpush1.bf16.msra.mxu0 0
    %135 = vmatprep.subr.bf16.mxu0 0
    %136 = vmatpush1.bf16.msra.mxu0 0
    %137 = vmatprep.subr.bf16.mxu0 0
    %138 = vmatpush1.bf16.msra.mxu0 %v121
    %139 = vmatprep.subr.bf16.mxu0 0
    %140 = vmatpush2.bf16.msra.mxu0 0
    %141 = vmatprep.subr.bf16.mxu0 0
    %142 = vmatpush2.bf16.msra.mxu0 0
    %143 = vmatprep.subr.bf16.mxu0 0
    %144 = vmatpush2.bf16.msra.mxu0 0
    %145 = vmatprep.subr.bf16.mxu0 0
    %146 = vmatpush2.bf16.msra.mxu0 0
    %147 = vmatprep.subr.bf16.mxu0 0
    %148 = vmatpush2.bf16.msra.mxu0 0
    %149 = vmatprep.subr.bf16.mxu0 0
    %150 = vmatpush2.bf16.msra.mxu0 0
    %151 = vmatprep.subr.bf16.mxu0 0
    %152 = vmatpush2.bf16.msra.mxu0 0
    %153 = vmatprep.subr.bf16.mxu0 0
    %154 = vmatpush2.bf16.msra.mxu0 0
    %155 = vmatprep.mubr.bf16.mxu0 0
    %156 = vmatmul.mubr.bf16.gmra.mxu0 %v115
    %v157 = vpop.f32.mrf.mxu0
    %v158 = vadd.f32 %v100, %v157
    %v159 = vpop.f32.mrf.mxu0
    %v160 = vpop.f32.mrf.mxu0
    %v161 = vadd.f32 %v103, %v160
    %v162 = vpop.f32.mrf.mxu0
    %163 = vmatprep.mubr.bf16.mxu0 0
    %164 = vmatmul.mubr.bf16.gmra.mxu0 %v118
    %v165 = vpop.f32.mrf.mxu0
    %v166 = vadd.f32 %v108, %v165
    %v167 = vpop.f32.mrf.mxu0
    %v168 = vpop.f32.mrf.mxu0
    %v169 = vadd.f32 %v111, %v168
    %v170 = vpop.f32.mrf.mxu0
    %171 = vdwg.mxu0
    %s172 = scalar_lea.vmem %s0, 2
    %v173 = vld [vmem:[%s172] ss:$2 sm:$0xff]
    %s174 = scalar_lea.vmem %s0, 18
    %v175 = vld [vmem:[%s174] ss:$2 sm:$0xff]
    %s176 = scalar_lea.vmem %s0, 42
    %v177 = vld [vmem:[%s176] ss:$2 sm:$0xff]
    %s178 = scalar_lea.vmem %s0, 58
    %v179 = vld [vmem:[%s178] ss:$2 sm:$0xff]
    %v180 = vpack.c.bf16 %v175, %v173
    %v181 = vpack.c.bf16 %v179, %v177
    %s182 = scalar_lea.vmem %s1, 4
    %v183 = vld [vmem:[%s182] sm:$0x3]
    %v185 = vsel %vm54, %v180, 0
    %v188 = vsel %vm54, %v181, 0
    %v191 = vsel %vm61, %v183, 0
    %193 = vmatprep.subr.bf16.mxu0 0
    %194 = vmatpush1.bf16.msra.mxu0 0
    %195 = vmatprep.subr.bf16.mxu0 0
    %196 = vmatpush1.bf16.msra.mxu0 0
    %197 = vmatprep.subr.bf16.mxu0 0
    %198 = vmatpush1.bf16.msra.mxu0 0
    %199 = vmatprep.subr.bf16.mxu0 0
    %200 = vmatpush1.bf16.msra.mxu0 0
    %201 = vmatprep.subr.bf16.mxu0 0
    %202 = vmatpush1.bf16.msra.mxu0 0
    %203 = vmatprep.subr.bf16.mxu0 0
    %204 = vmatpush1.bf16.msra.mxu0 0
    %205 = vmatprep.subr.bf16.mxu0 0
    %206 = vmatpush1.bf16.msra.mxu0 0
    %207 = vmatprep.subr.bf16.mxu0 0
    %208 = vmatpush1.bf16.msra.mxu0 %v191
    %209 = vmatprep.subr.bf16.mxu0 0
    %210 = vmatpush2.bf16.msra.mxu0 0
    %211 = vmatprep.subr.bf16.mxu0 0
    %212 = vmatpush2.bf16.msra.mxu0 0
    %213 = vmatprep.subr.bf16.mxu0 0
    %214 = vmatpush2.bf16.msra.mxu0 0
    %215 = vmatprep.subr.bf16.mxu0 0
    %216 = vmatpush2.bf16.msra.mxu0 0
    %217 = vmatprep.subr.bf16.mxu0 0
    %218 = vmatpush2.bf16.msra.mxu0 0
    %219 = vmatprep.subr.bf16.mxu0 0
    %220 = vmatpush2.bf16.msra.mxu0 0
    %221 = vmatprep.subr.bf16.mxu0 0
    %222 = vmatpush2.bf16.msra.mxu0 0
    %223 = vmatprep.subr.bf16.mxu0 0
    %224 = vmatpush2.bf16.msra.mxu0 0
    %225 = vmatprep.mubr.bf16.mxu0 0
    %226 = vmatmul.mubr.bf16.gmra.mxu0 %v185
    %v227 = vpop.f32.mrf.mxu0
    %v228 = vadd.f32 0.0, %v227
    %v229 = vpop.f32.mrf.mxu0
    %v230 = vpop.f32.mrf.mxu0
    %v231 = vadd.f32 0.0, %v230
    %v232 = vpop.f32.mrf.mxu0
    %233 = vmatprep.mubr.bf16.mxu0 0
    %234 = vmatmul.mubr.bf16.gmra.mxu0 %v188
    %v235 = vpop.f32.mrf.mxu0
    %v236 = vadd.f32 0.0, %v235
    %v237 = vpop.f32.mrf.mxu0
    %v238 = vpop.f32.mrf.mxu0
    %v239 = vadd.f32 0.0, %v238
    %v240 = vpop.f32.mrf.mxu0
    %241 = vdwg.mxu0
    %v242 = vadd.f32 %v158, %v228
    %v243 = vadd.f32 %v161, %v231
    %v244 = vadd.f32 %v166, %v236
    %v245 = vadd.f32 %v169, %v239
    %246 = vmatprep.subr.bf16.mxu0 0
    %247 = vmatpush1.bf16.msra.mxu0 0
    %248 = vmatprep.subr.bf16.mxu0 0
    %249 = vmatpush1.bf16.msra.mxu0 0
    %250 = vmatprep.subr.bf16.mxu0 0
    %251 = vmatpush1.bf16.msra.mxu0 0
    %252 = vmatprep.subr.bf16.mxu0 0
    %253 = vmatpush1.bf16.msra.mxu0 0
    %254 = vmatprep.subr.bf16.mxu0 0
    %255 = vmatpush1.bf16.msra.mxu0 0
    %256 = vmatprep.subr.bf16.mxu0 0
    %257 = vmatpush1.bf16.msra.mxu0 0
    %258 = vmatprep.subr.bf16.mxu0 0
    %259 = vmatpush1.bf16.msra.mxu0 0
    %260 = vmatprep.subr.bf16.mxu0 0
    %261 = vmatpush1.bf16.msra.mxu0 %v63
    %262 = vmatprep.subr.bf16.mxu0 0
    %263 = vmatpush2.bf16.msra.mxu0 0
    %264 = vmatprep.subr.bf16.mxu0 0
    %265 = vmatpush2.bf16.msra.mxu0 0
    %266 = vmatprep.subr.bf16.mxu0 0
    %267 = vmatpush2.bf16.msra.mxu0 0
    %268 = vmatprep.subr.bf16.mxu0 0
    %269 = vmatpush2.bf16.msra.mxu0 0
    %270 = vmatprep.subr.bf16.mxu0 0
    %271 = vmatpush2.bf16.msra.mxu0 0
    %272 = vmatprep.subr.bf16.mxu0 0
    %273 = vmatpush2.bf16.msra.mxu0 0
    %274 = vmatprep.subr.bf16.mxu0 0
    %275 = vmatpush2.bf16.msra.mxu0 0
    %276 = vmatprep.subr.bf16.mxu0 0
    %277 = vmatpush2.bf16.msra.mxu0 0
    %278 = vmatprep.mubr.bf16.mxu0 0
    %279 = vmatmul.mubr.bf16.gmra.mxu0 %v185
    %v280 = vpop.f32.mrf.mxu0
    %v281 = vadd.f32 0.0, %v280
    %v282 = vpop.f32.mrf.mxu0
    %v283 = vpop.f32.mrf.mxu0
    %v284 = vadd.f32 0.0, %v283
    %v285 = vpop.f32.mrf.mxu0
    %286 = vmatprep.mubr.bf16.mxu0 0
    %287 = vmatmul.mubr.bf16.gmra.mxu0 %v188
    %v288 = vpop.f32.mrf.mxu0
    %v289 = vadd.f32 0.0, %v288
    %v290 = vpop.f32.mrf.mxu0
    %v291 = vpop.f32.mrf.mxu0
    %v292 = vadd.f32 0.0, %v291
    %v293 = vpop.f32.mrf.mxu0
    %294 = vdwg.mxu0
    %295 = vmatprep.subr.bf16.mxu0 0
    %296 = vmatpush1.bf16.msra.mxu0 0
    %297 = vmatprep.subr.bf16.mxu0 0
    %298 = vmatpush1.bf16.msra.mxu0 0
    %299 = vmatprep.subr.bf16.mxu0 0
    %300 = vmatpush1.bf16.msra.mxu0 0
    %301 = vmatprep.subr.bf16.mxu0 0
    %302 = vmatpush1.bf16.msra.mxu0 0
    %303 = vmatprep.subr.bf16.mxu0 0
    %304 = vmatpush1.bf16.msra.mxu0 0
    %305 = vmatprep.subr.bf16.mxu0 0
    %306 = vmatpush1.bf16.msra.mxu0 0
    %307 = vmatprep.subr.bf16.mxu0 0
    %308 = vmatpush1.bf16.msra.mxu0 0
    %309 = vmatprep.subr.bf16.mxu0 0
    %310 = vmatpush1.bf16.msra.mxu0 %v121
    %311 = vmatprep.subr.bf16.mxu0 0
    %312 = vmatpush2.bf16.msra.mxu0 0
    %313 = vmatprep.subr.bf16.mxu0 0
    %314 = vmatpush2.bf16.msra.mxu0 0
    %315 = vmatprep.subr.bf16.mxu0 0
    %316 = vmatpush2.bf16.msra.mxu0 0
    %317 = vmatprep.subr.bf16.mxu0 0
    %318 = vmatpush2.bf16.msra.mxu0 0
    %319 = vmatprep.subr.bf16.mxu0 0
    %320 = vmatpush2.bf16.msra.mxu0 0
    %321 = vmatprep.subr.bf16.mxu0 0
    %322 = vmatpush2.bf16.msra.mxu0 0
    %323 = vmatprep.subr.bf16.mxu0 0
    %324 = vmatpush2.bf16.msra.mxu0 0
    %325 = vmatprep.subr.bf16.mxu0 0
    %326 = vmatpush2.bf16.msra.mxu0 0
    %327 = vmatprep.mubr.bf16.mxu0 0
    %328 = vmatmul.mubr.bf16.gmra.mxu0 %v56
    %v329 = vpop.f32.mrf.mxu0
    %v330 = vadd.f32 %v281, %v329
    %v331 = vpop.f32.mrf.mxu0
    %v332 = vpop.f32.mrf.mxu0
    %v333 = vadd.f32 %v284, %v332
    %v334 = vpop.f32.mrf.mxu0
    %335 = vmatprep.mubr.bf16.mxu0 0
    %336 = vmatmul.mubr.bf16.gmra.mxu0 %v59
    %v337 = vpop.f32.mrf.mxu0
    %v338 = vadd.f32 %v289, %v337
    %v339 = vpop.f32.mrf.mxu0
    %v340 = vpop.f32.mrf.mxu0
    %v341 = vadd.f32 %v292, %v340
    %v342 = vpop.f32.mrf.mxu0
    %343 = vdwg.mxu0
    %s344 = scalar_lea.vmem %s0, 3
    %v345 = vld [vmem:[%s344] ss:$2 sm:$0xff]
    %s346 = scalar_lea.vmem %s0, 19
    %v347 = vld [vmem:[%s346] ss:$2 sm:$0xff]
    %s348 = scalar_lea.vmem %s0, 43
    %v349 = vld [vmem:[%s348] ss:$2 sm:$0xff]
    %s350 = scalar_lea.vmem %s0, 59
    %v351 = vld [vmem:[%s350] ss:$2 sm:$0xff]
    %v352 = vpack.c.bf16 %v347, %v345
    %v353 = vpack.c.bf16 %v351, %v349
    %v355 = vsel %vm54, %v352, 0
    %v358 = vsel %vm54, %v353, 0
    %360 = vmatprep.subr.bf16.mxu0 0
    %361 = vmatpush1.bf16.msra.mxu0 0
    %362 = vmatprep.subr.bf16.mxu0 0
    %363 = vmatpush1.bf16.msra.mxu0 0
    %364 = vmatprep.subr.bf16.mxu0 0
    %365 = vmatpush1.bf16.msra.mxu0 0
    %366 = vmatprep.subr.bf16.mxu0 0
    %367 = vmatpush1.bf16.msra.mxu0 0
    %368 = vmatprep.subr.bf16.mxu0 0
    %369 = vmatpush1.bf16.msra.mxu0 0
    %370 = vmatprep.subr.bf16.mxu0 0
    %371 = vmatpush1.bf16.msra.mxu0 0
    %372 = vmatprep.subr.bf16.mxu0 0
    %373 = vmatpush1.bf16.msra.mxu0 0
    %374 = vmatprep.subr.bf16.mxu0 0
    %375 = vmatpush1.bf16.msra.mxu0 %v191
    %376 = vmatprep.subr.bf16.mxu0 0
    %377 = vmatpush2.bf16.msra.mxu0 0
    %378 = vmatprep.subr.bf16.mxu0 0
    %379 = vmatpush2.bf16.msra.mxu0 0
    %380 = vmatprep.subr.bf16.mxu0 0
    %381 = vmatpush2.bf16.msra.mxu0 0
    %382 = vmatprep.subr.bf16.mxu0 0
    %383 = vmatpush2.bf16.msra.mxu0 0
    %384 = vmatprep.subr.bf16.mxu0 0
    %385 = vmatpush2.bf16.msra.mxu0 0
    %386 = vmatprep.subr.bf16.mxu0 0
    %387 = vmatpush2.bf16.msra.mxu0 0
    %388 = vmatprep.subr.bf16.mxu0 0
    %389 = vmatpush2.bf16.msra.mxu0 0
    %390 = vmatprep.subr.bf16.mxu0 0
    %391 = vmatpush2.bf16.msra.mxu0 0
    %392 = vmatprep.mubr.bf16.mxu0 0
    %393 = vmatmul.mubr.bf16.gmra.mxu0 %v355
    %v394 = vpop.f32.mrf.mxu0
    %v395 = vadd.f32 0.0, %v394
    %v396 = vpop.f32.mrf.mxu0
    %v397 = vpop.f32.mrf.mxu0
    %v398 = vadd.f32 0.0, %v397
    %v399 = vpop.f32.mrf.mxu0
    %400 = vmatprep.mubr.bf16.mxu0 0
    %401 = vmatmul.mubr.bf16.gmra.mxu0 %v358
    %v402 = vpop.f32.mrf.mxu0
    %v403 = vadd.f32 0.0, %v402
    %v404 = vpop.f32.mrf.mxu0
    %v405 = vpop.f32.mrf.mxu0
    %v406 = vadd.f32 0.0, %v405
    %v407 = vpop.f32.mrf.mxu0
    %408 = vdwg.mxu0
    %v409 = vadd.f32 %v330, %v395
    %v410 = vadd.f32 %v333, %v398
    %v411 = vadd.f32 %v338, %v403
    %v412 = vadd.f32 %v341, %v406
    %v413 = vlaneseq
    %v414 = vshrl.u32 %v413, 7
    %v415 = vsub.s32 0, %v414
    %v416 = vrot.slane %v31, %v415
    %v417 = vadd.f32 %v242, %v416
    %v418 = vadd.f32 %v243, %v416
    %v419 = vadd.f32 %v244, %v416
    %v420 = vadd.f32 %v245, %v416
    %v421 = vmax.f32 %v417, 0.0
    %v422 = vmax.f32 %v418, 0.0
    %v423 = vmax.f32 %v419, 0.0
    %v424 = vmax.f32 %v420, 0.0
    %v425 = vadd.f32 %v409, %v416
    %v426 = vadd.f32 %v410, %v416
    %v427 = vadd.f32 %v411, %v416
    %v428 = vadd.f32 %v412, %v416
    %v429 = vmax.f32 %v425, 0.0
    %v430 = vmax.f32 %v426, 0.0
    %v431 = vmax.f32 %v427, 0.0
    %v432 = vmax.f32 %v428, 0.0
    %v433 = vmax.f32 %v421, %v429
    %v434 = vmax.f32 %v422, %v430
    %v435 = vmax.f32 %v423, %v431
    %v436 = vmax.f32 %v424, %v432
    %v437 = vld [vmem:[%s7 + $0x1] sm:$0x1]
    %vm438 = vcmask 57344
    %439 = vst.msk [vmem:[#allocation2 + $0x7] sm:$0x1] %vm438, 0.0
    %440 = vst.msk [vmem:[#allocation2 + $0x27] sm:$0x1] %vm438, 0.0
    %441 = vst.msk [vmem:[#allocation2 + $0x18] sm:$0x1] %vm438, 0.0
    %442 = vst.msk [vmem:[#allocation2 + $0x38] sm:$0x1] %vm438, 0.0
    %vm443 = vcmask 64512
    %444 = vst.msk [vmem:[#allocation2 + $0x8] sm:$0xff] %vm443, %v433
    %445 = vst.msk [vmem:[#allocation2 + $0x10] sm:$0xff] %vm443, %v434
    %446 = vst.msk [vmem:[#allocation2 + $0x28] sm:$0xff] %vm443, %v435
    %447 = vst.msk [vmem:[#allocation2 + $0x30] sm:$0xff] %vm443, %v436
    %s448 = scalar_lea.vmem [#allocation2], 7
    %v449 = vld [vmem:[%s448] ss:$2 sm:$0xff]
    %s450 = scalar_lea.vmem [#allocation2], 39
    %v451 = vld [vmem:[%s450] ss:$2 sm:$0xff]
    %v452 = vpack.c.bf16 %v451, %v449
    %v453 = vld [vmem:[%s2] sm:$0xf]
    %s454 = scalar_lea.vmem [#allocation2], 8
    %v455 = vld [vmem:[%s454] ss:$2 sm:$0xff]
    %s456 = scalar_lea.vmem [#allocation2], 40
    %v457 = vld [vmem:[%s456] ss:$2 sm:$0xff]
    %v458 = vpack.c.bf16 %v457, %v455
    %s459 = scalar_lea.vmem %s2, 4
    %v460 = vld [vmem:[%s459] sm:$0xf]
    %v462 = vsel %vm443, %v458, 0
    %vm464 = vcmask 1043456
    %v466 = vsel %vm464, %v460, 0
    %468 = vmatprep.subr.bf16.mxu0 0
    %469 = vmatpush1.bf16.msra.mxu0 0
    %470 = vmatprep.subr.bf16.mxu0 0
    %471 = vmatpush1.bf16.msra.mxu0 0
    %472 = vmatprep.subr.bf16.mxu0 0
    %473 = vmatpush1.bf16.msra.mxu0 0
    %474 = vmatprep.subr.bf16.mxu0 0
    %475 = vmatpush1.bf16.msra.mxu0 0
    %476 = vmatprep.subr.bf16.mxu0 0
    %477 = vmatpush1.bf16.msra.mxu0 0
    %478 = vmatprep.subr.bf16.mxu0 0
    %479 = vmatpush1.bf16.msra.mxu0 0
    %480 = vmatprep.subr.bf16.mxu0 0
    %481 = vmatpush1.bf16.msra.mxu0 0
    %482 = vmatprep.subr.bf16.mxu0 0
    %483 = vmatpush1.bf16.msra.mxu0 %v466
    %484 = vmatprep.subr.bf16.mxu0 0
    %485 = vmatpush2.bf16.msra.mxu0 0
    %486 = vmatprep.subr.bf16.mxu0 0
    %487 = vmatpush2.bf16.msra.mxu0 0
    %488 = vmatprep.subr.bf16.mxu0 0
    %489 = vmatpush2.bf16.msra.mxu0 0
    %490 = vmatprep.subr.bf16.mxu0 0
    %491 = vmatpush2.bf16.msra.mxu0 0
    %492 = vmatprep.subr.bf16.mxu0 0
    %493 = vmatpush2.bf16.msra.mxu0 0
    %494 = vmatprep.subr.bf16.mxu0 0
    %495 = vmatpush2.bf16.msra.mxu0 0
    %496 = vmatprep.subr.bf16.mxu0 0
    %497 = vmatpush2.bf16.msra.mxu0 0
    %498 = vmatprep.subr.bf16.mxu0 0
    %499 = vmatpush2.bf16.msra.mxu0 0
    %500 = vmatprep.mubr.bf16.mxu0 0
    %501 = vmatmul.mubr.bf16.gmra.mxu0 %v462
    %v502 = vpop.f32.mrf.mxu0
    %v503 = vadd.f32 0.0, %v502
    %v504 = vpop.f32.mrf.mxu0
    %v505 = vpop.f32.mrf.mxu0
    %v506 = vadd.f32 0.0, %v505
    %v507 = vpop.f32.mrf.mxu0
    %508 = vdwg.mxu0
    %v510 = vsel %vm443, %v452, 0
    %v513 = vsel %vm464, %v453, 0
    %515 = vmatprep.subr.bf16.mxu0 0
    %516 = vmatpush1.bf16.msra.mxu0 0
    %517 = vmatprep.subr.bf16.mxu0 0
    %518 = vmatpush1.bf16.msra.mxu0 0
    %519 = vmatprep.subr.bf16.mxu0 0
    %520 = vmatpush1.bf16.msra.mxu0 0
    %521 = vmatprep.subr.bf16.mxu0 0
    %522 = vmatpush1.bf16.msra.mxu0 0
    %523 = vmatprep.subr.bf16.mxu0 0
    %524 = vmatpush1.bf16.msra.mxu0 0
    %525 = vmatprep.subr.bf16.mxu0 0
    %526 = vmatpush1.bf16.msra.mxu0 0
    %527 = vmatprep.subr.bf16.mxu0 0
    %528 = vmatpush1.bf16.msra.mxu0 0
    %529 = vmatprep.subr.bf16.mxu0 0
    %530 = vmatpush1.bf16.msra.mxu0 %v513
    %531 = vmatprep.subr.bf16.mxu0 0
    %532 = vmatpush2.bf16.msra.mxu0 0
    %533 = vmatprep.subr.bf16.mxu0 0
    %534 = vmatpush2.bf16.msra.mxu0 0
    %535 = vmatprep.subr.bf16.mxu0 0
    %536 = vmatpush2.bf16.msra.mxu0 0
    %537 = vmatprep.subr.bf16.mxu0 0
    %538 = vmatpush2.bf16.msra.mxu0 0
    %539 = vmatprep.subr.bf16.mxu0 0
    %540 = vmatpush2.bf16.msra.mxu0 0
    %541 = vmatprep.subr.bf16.mxu0 0
    %542 = vmatpush2.bf16.msra.mxu0 0
    %543 = vmatprep.subr.bf16.mxu0 0
    %544 = vmatpush2.bf16.msra.mxu0 0
    %545 = vmatprep.subr.bf16.mxu0 0
    %546 = vmatpush2.bf16.msra.mxu0 0
    %547 = vmatprep.mubr.bf16.mxu0 0
    %548 = vmatmul.mubr.bf16.gmra.mxu0 %v510
    %v549 = vpop.f32.mrf.mxu0
    %v550 = vadd.f32 %v503, %v549
    %v551 = vpop.f32.mrf.mxu0
    %v552 = vpop.f32.mrf.mxu0
    %v553 = vadd.f32 %v506, %v552
    %v554 = vpop.f32.mrf.mxu0
    %555 = vdwg.mxu0
    %s556 = scalar_lea.vmem [#allocation2], 9
    %v557 = vld [vmem:[%s556] ss:$2 sm:$0xff]
    %s558 = scalar_lea.vmem [#allocation2], 41
    %v559 = vld [vmem:[%s558] ss:$2 sm:$0xff]
    %v560 = vpack.c.bf16 %v559, %v557
    %s561 = scalar_lea.vmem %s2, 8
    %v562 = vld [vmem:[%s561] sm:$0xf]
    %v564 = vsel %vm443, %v560, 0
    %v567 = vsel %vm464, %v562, 0
    %569 = vmatprep.subr.bf16.mxu0 0
    %570 = vmatpush1.bf16.msra.mxu0 0
    %571 = vmatprep.subr.bf16.mxu0 0
    %572 = vmatpush1.bf16.msra.mxu0 0
    %573 = vmatprep.subr.bf16.mxu0 0
    %574 = vmatpush1.bf16.msra.mxu0 0
    %575 = vmatprep.subr.bf16.mxu0 0
    %576 = vmatpush1.bf16.msra.mxu0 0
    %577 = vmatprep.subr.bf16.mxu0 0
    %578 = vmatpush1.bf16.msra.mxu0 0
    %579 = vmatprep.subr.bf16.mxu0 0
    %580 = vmatpush1.bf16.msra.mxu0 0
    %581 = vmatprep.subr.bf16.mxu0 0
    %582 = vmatpush1.bf16.msra.mxu0 0
    %583 = vmatprep.subr.bf16.mxu0 0
    %584 = vmatpush1.bf16.msra.mxu0 %v567
    %585 = vmatprep.subr.bf16.mxu0 0
    %586 = vmatpush2.bf16.msra.mxu0 0
    %587 = vmatprep.subr.bf16.mxu0 0
    %588 = vmatpush2.bf16.msra.mxu0 0
    %589 = vmatprep.subr.bf16.mxu0 0
    %590 = vmatpush2.bf16.msra.mxu0 0
    %591 = vmatprep.subr.bf16.mxu0 0
    %592 = vmatpush2.bf16.msra.mxu0 0
    %593 = vmatprep.subr.bf16.mxu0 0
    %594 = vmatpush2.bf16.msra.mxu0 0
    %595 = vmatprep.subr.bf16.mxu0 0
    %596 = vmatpush2.bf16.msra.mxu0 0
    %597 = vmatprep.subr.bf16.mxu0 0
    %598 = vmatpush2.bf16.msra.mxu0 0
    %599 = vmatprep.subr.bf16.mxu0 0
    %600 = vmatpush2.bf16.msra.mxu0 0
    %601 = vmatprep.mubr.bf16.mxu0 0
    %602 = vmatmul.mubr.bf16.gmra.mxu0 %v564
    %v603 = vpop.f32.mrf.mxu0
    %v604 = vadd.f32 0.0, %v603
    %v605 = vpop.f32.mrf.mxu0
    %v606 = vpop.f32.mrf.mxu0
    %v607 = vadd.f32 0.0, %v606
    %v608 = vpop.f32.mrf.mxu0
    %609 = vdwg.mxu0
    %v610 = vadd.f32 %v550, %v604
    %v611 = vadd.f32 %v553, %v607
    %612 = vmatprep.subr.bf16.mxu0 0
    %613 = vmatpush1.bf16.msra.mxu0 0
    %614 = vmatprep.subr.bf16.mxu0 0
    %615 = vmatpush1.bf16.msra.mxu0 0
    %616 = vmatprep.subr.bf16.mxu0 0
    %617 = vmatpush1.bf16.msra.mxu0 0
    %618 = vmatprep.subr.bf16.mxu0 0
    %619 = vmatpush1.bf16.msra.mxu0 0
    %620 = vmatprep.subr.bf16.mxu0 0
    %621 = vmatpush1.bf16.msra.mxu0 0
    %622 = vmatprep.subr.bf16.mxu0 0
    %623 = vmatpush1.bf16.msra.mxu0 0
    %624 = vmatprep.subr.bf16.mxu0 0
    %625 = vmatpush1.bf16.msra.mxu0 0
    %626 = vmatprep.subr.bf16.mxu0 0
    %627 = vmatpush1.bf16.msra.mxu0 %v466
    %628 = vmatprep.subr.bf16.mxu0 0
    %629 = vmatpush2.bf16.msra.mxu0 0
    %630 = vmatprep.subr.bf16.mxu0 0
    %631 = vmatpush2.bf16.msra.mxu0 0
    %632 = vmatprep.subr.bf16.mxu0 0
    %633 = vmatpush2.bf16.msra.mxu0 0
    %634 = vmatprep.subr.bf16.mxu0 0
    %635 = vmatpush2.bf16.msra.mxu0 0
    %636 = vmatprep.subr.bf16.mxu0 0
    %637 = vmatpush2.bf16.msra.mxu0 0
    %638 = vmatprep.subr.bf16.mxu0 0
    %639 = vmatpush2.bf16.msra.mxu0 0
    %640 = vmatprep.subr.bf16.mxu0 0
    %641 = vmatpush2.bf16.msra.mxu0 0
    %642 = vmatprep.subr.bf16.mxu0 0
    %643 = vmatpush2.bf16.msra.mxu0 0
    %644 = vmatprep.mubr.bf16.mxu0 0
    %645 = vmatmul.mubr.bf16.gmra.mxu0 %v564
    %v646 = vpop.f32.mrf.mxu0
    %v647 = vadd.f32 0.0, %v646
    %v648 = vpop.f32.mrf.mxu0
    %v649 = vpop.f32.mrf.mxu0
    %v650 = vadd.f32 0.0, %v649
    %v651 = vpop.f32.mrf.mxu0
    %652 = vdwg.mxu0
    %653 = vmatprep.subr.bf16.mxu0 0
    %654 = vmatpush1.bf16.msra.mxu0 0
    %655 = vmatprep.subr.bf16.mxu0 0
    %656 = vmatpush1.bf16.msra.mxu0 0
    %657 = vmatprep.subr.bf16.mxu0 0
    %658 = vmatpush1.bf16.msra.mxu0 0
    %659 = vmatprep.subr.bf16.mxu0 0
    %660 = vmatpush1.bf16.msra.mxu0 0
    %661 = vmatprep.subr.bf16.mxu0 0
    %662 = vmatpush1.bf16.msra.mxu0 0
    %663 = vmatprep.subr.bf16.mxu0 0
    %664 = vmatpush1.bf16.msra.mxu0 0
    %665 = vmatprep.subr.bf16.mxu0 0
    %666 = vmatpush1.bf16.msra.mxu0 0
    %667 = vmatprep.subr.bf16.mxu0 0
    %668 = vmatpush1.bf16.msra.mxu0 %v513
    %669 = vmatprep.subr.bf16.mxu0 0
    %670 = vmatpush2.bf16.msra.mxu0 0
    %671 = vmatprep.subr.bf16.mxu0 0
    %672 = vmatpush2.bf16.msra.mxu0 0
    %673 = vmatprep.subr.bf16.mxu0 0
    %674 = vmatpush2.bf16.msra.mxu0 0
    %675 = vmatprep.subr.bf16.mxu0 0
    %676 = vmatpush2.bf16.msra.mxu0 0
    %677 = vmatprep.subr.bf16.mxu0 0
    %678 = vmatpush2.bf16.msra.mxu0 0
    %679 = vmatprep.subr.bf16.mxu0 0
    %680 = vmatpush2.bf16.msra.mxu0 0
    %681 = vmatprep.subr.bf16.mxu0 0
    %682 = vmatpush2.bf16.msra.mxu0 0
    %683 = vmatprep.subr.bf16.mxu0 0
    %684 = vmatpush2.bf16.msra.mxu0 0
    %685 = vmatprep.mubr.bf16.mxu0 0
    %686 = vmatmul.mubr.bf16.gmra.mxu0 %v462
    %v687 = vpop.f32.mrf.mxu0
    %v688 = vadd.f32 %v647, %v687
    %v689 = vpop.f32.mrf.mxu0
    %v690 = vpop.f32.mrf.mxu0
    %v691 = vadd.f32 %v650, %v690
    %v692 = vpop.f32.mrf.mxu0
    %693 = vdwg.mxu0
    %s694 = scalar_lea.vmem [#allocation2], 10
    %v695 = vld [vmem:[%s694] ss:$2 sm:$0xff]
    %s696 = scalar_lea.vmem [#allocation2], 42
    %v697 = vld [vmem:[%s696] ss:$2 sm:$0xff]
    %v698 = vpack.c.bf16 %v697, %v695
    %v700 = vsel %vm443, %v698, 0
    %702 = vmatprep.subr.bf16.mxu0 0
    %703 = vmatpush1.bf16.msra.mxu0 0
    %704 = vmatprep.subr.bf16.mxu0 0
    %705 = vmatpush1.bf16.msra.mxu0 0
    %706 = vmatprep.subr.bf16.mxu0 0
    %707 = vmatpush1.bf16.msra.mxu0 0
    %708 = vmatprep.subr.bf16.mxu0 0
    %709 = vmatpush1.bf16.msra.mxu0 0
    %710 = vmatprep.subr.bf16.mxu0 0
    %711 = vmatpush1.bf16.msra.mxu0 0
    %712 = vmatprep.subr.bf16.mxu0 0
    %713 = vmatpush1.bf16.msra.mxu0 0
    %714 = vmatprep.subr.bf16.mxu0 0
    %715 = vmatpush1.bf16.msra.mxu0 0
    %716 = vmatprep.subr.bf16.mxu0 0
    %717 = vmatpush1.bf16.msra.mxu0 %v567
    %718 = vmatprep.subr.bf16.mxu0 0
    %719 = vmatpush2.bf16.msra.mxu0 0
    %720 = vmatprep.subr.bf16.mxu0 0
    %721 = vmatpush2.bf16.msra.mxu0 0
    %722 = vmatprep.subr.bf16.mxu0 0
    %723 = vmatpush2.bf16.msra.mxu0 0
    %724 = vmatprep.subr.bf16.mxu0 0
    %725 = vmatpush2.bf16.msra.mxu0 0
    %726 = vmatprep.subr.bf16.mxu0 0
    %727 = vmatpush2.bf16.msra.mxu0 0
    %728 = vmatprep.subr.bf16.mxu0 0
    %729 = vmatpush2.bf16.msra.mxu0 0
    %730 = vmatprep.subr.bf16.mxu0 0
    %731 = vmatpush2.bf16.msra.mxu0 0
    %732 = vmatprep.subr.bf16.mxu0 0
    %733 = vmatpush2.bf16.msra.mxu0 0
    %734 = vmatprep.mubr.bf16.mxu0 0
    %735 = vmatmul.mubr.bf16.gmra.mxu0 %v700
    %v736 = vpop.f32.mrf.mxu0
    %v737 = vadd.f32 0.0, %v736
    %v738 = vpop.f32.mrf.mxu0
    %v739 = vpop.f32.mrf.mxu0
    %v740 = vadd.f32 0.0, %v739
    %v741 = vpop.f32.mrf.mxu0
    %742 = vdwg.mxu0
    %v743 = vadd.f32 %v688, %v737
    %v744 = vadd.f32 %v691, %v740
    %v745 = vlaneseq
    %v746 = vshrl.u32 %v745, 7
    %v747 = vsub.s32 0, %v746
    %v748 = vrot.slane %v437, %v747
    %v749 = vadd.f32 %v610, %v748
    %v750 = vadd.f32 %v611, %v748
    %v751 = vmax.f32 %v749, 0.0
    %v752 = vmax.f32 %v750, 0.0
    %v753 = vadd.f32 %v743, %v748
    %v754 = vadd.f32 %v744, %v748
    %v755 = vmax.f32 %v753, 0.0
    %v756 = vmax.f32 %v754, 0.0
    %v757 = vmax.f32 %v751, %v755
    %v758 = vmax.f32 %v752, %v756
    %v759 = vld [vmem:[%s7 + $0x2] sm:$0x1]
    %vm760 = vcmask 122880
    %761 = vst.msk [vmem:[#allocation3 + $0x7] sm:$0x1] %vm760, 0.0
    %762 = vst.msk [vmem:[#allocation3 + $0x1f] sm:$0x1] %vm760, 0.0
    %763 = vst.msk [vmem:[#allocation3 + $0x10] sm:$0x1] %vm760, 0.0
    %764 = vst.msk [vmem:[#allocation3 + $0x28] sm:$0x1] %vm760, 0.0
    %vm765 = vcmask 130048
    %766 = vst.msk [vmem:[#allocation3 + $0x8] sm:$0xff] %vm765, %v757
    %767 = vst.msk [vmem:[#allocation3 + $0x20] sm:$0xff] %vm765, %v758
    %v768 = vld [vmem:[#allocation3 + $0x7] sm:$0xff]
    %v769 = vld [vmem:[#allocation3 + $0x1f] sm:$0xff]
    %v770 = vpack.c.bf16 %v769, %v768
    %v771 = vld [vmem:[%s3] sm:$0xf]
    %v772 = vld [vmem:[%s3 + $0x4] sm:$0xf]
    %v773 = vld [vmem:[#allocation3 + $0x8] sm:$0xff]
    %v774 = vld [vmem:[#allocation3 + $0x20] sm:$0xff]
    %v775 = vpack.c.bf16 %v774, %v773
    %s776 = scalar_lea.vmem %s3, 8
    %v777 = vld [vmem:[%s776] sm:$0xf]
    %v778 = vld [vmem:[%s776 + $0x4] sm:$0xf]
    %v781 = vunpack.c.l.b16 %v777
    %v782 = vunpack.c.l.b16 %v778
    %v783 = vpack.c.b16 %v782, %v781
    %v786 = vsel %vm765, %v775, 0
    %788 = vmatprep.subr.bf16.mxu0 0
    %789 = vmatpush1.bf16.msra.mxu0 0
    %790 = vmatprep.subr.bf16.mxu0 0
    %791 = vmatpush1.bf16.msra.mxu0 0
    %792 = vmatprep.subr.bf16.mxu0 0
    %793 = vmatpush1.bf16.msra.mxu0 0
    %794 = vmatprep.subr.bf16.mxu0 0
    %795 = vmatpush1.bf16.msra.mxu0 0
    %796 = vmatprep.subr.bf16.mxu0 0
    %797 = vmatpush1.bf16.msra.mxu0 0
    %798 = vmatprep.subr.bf16.mxu0 0
    %799 = vmatpush1.bf16.msra.mxu0 0
    %800 = vmatprep.subr.bf16.mxu0 0
    %801 = vmatpush1.bf16.msra.mxu0 0
    %802 = vmatprep.subr.bf16.mxu0 0
    %803 = vmatpush1.bf16.msra.mxu0 %v783
    %804 = vmatprep.subr.bf16.mxu0 0
    %805 = vmatpush2.bf16.msra.mxu0 0
    %806 = vmatprep.subr.bf16.mxu0 0
    %807 = vmatpush2.bf16.msra.mxu0 0
    %808 = vmatprep.subr.bf16.mxu0 0
    %809 = vmatpush2.bf16.msra.mxu0 0
    %810 = vmatprep.subr.bf16.mxu0 0
    %811 = vmatpush2.bf16.msra.mxu0 0
    %812 = vmatprep.subr.bf16.mxu0 0
    %813 = vmatpush2.bf16.msra.mxu0 0
    %814 = vmatprep.subr.bf16.mxu0 0
    %815 = vmatpush2.bf16.msra.mxu0 0
    %816 = vmatprep.subr.bf16.mxu0 0
    %817 = vmatpush2.bf16.msra.mxu0 0
    %818 = vmatprep.subr.bf16.mxu0 0
    %819 = vmatpush2.bf16.msra.mxu0 0
    %820 = vmatprep.mubr.bf16.mxu0 0
    %821 = vmatmul.mubr.bf16.gmra.mxu0 %v786
    %v822 = vpop.f32.mrf.mxu0
    %v823 = vadd.f32 0.0, %v822
    %v824 = vpop.f32.mrf.mxu0
    %v825 = vpop.f32.mrf.mxu0
    %v826 = vadd.f32 0.0, %v825
    %v827 = vpop.f32.mrf.mxu0
    %828 = vdwg.mxu0
    %v831 = vunpack.c.l.b16 %v771
    %v832 = vunpack.c.l.b16 %v772
    %v833 = vpack.c.b16 %v832, %v831
    %v836 = vsel %vm765, %v770, 0
    %838 = vmatprep.subr.bf16.mxu0 0
    %839 = vmatpush1.bf16.msra.mxu0 0
    %840 = vmatprep.subr.bf16.mxu0 0
    %841 = vmatpush1.bf16.msra.mxu0 0
    %842 = vmatprep.subr.bf16.mxu0 0
    %843 = vmatpush1.bf16.msra.mxu0 0
    %844 = vmatprep.subr.bf16.mxu0 0
    %845 = vmatpush1.bf16.msra.mxu0 0
    %846 = vmatprep.subr.bf16.mxu0 0
    %847 = vmatpush1.bf16.msra.mxu0 0
    %848 = vmatprep.subr.bf16.mxu0 0
    %849 = vmatpush1.bf16.msra.mxu0 0
    %850 = vmatprep.subr.bf16.mxu0 0
    %851 = vmatpush1.bf16.msra.mxu0 0
    %852 = vmatprep.subr.bf16.mxu0 0
    %853 = vmatpush1.bf16.msra.mxu0 %v833
    %854 = vmatprep.subr.bf16.mxu0 0
    %855 = vmatpush2.bf16.msra.mxu0 0
    %856 = vmatprep.subr.bf16.mxu0 0
    %857 = vmatpush2.bf16.msra.mxu0 0
    %858 = vmatprep.subr.bf16.mxu0 0
    %859 = vmatpush2.bf16.msra.mxu0 0
    %860 = vmatprep.subr.bf16.mxu0 0
    %861 = vmatpush2.bf16.msra.mxu0 0
    %862 = vmatprep.subr.bf16.mxu0 0
    %863 = vmatpush2.bf16.msra.mxu0 0
    %864 = vmatprep.subr.bf16.mxu0 0
    %865 = vmatpush2.bf16.msra.mxu0 0
    %866 = vmatprep.subr.bf16.mxu0 0
    %867 = vmatpush2.bf16.msra.mxu0 0
    %868 = vmatprep.subr.bf16.mxu0 0
    %869 = vmatpush2.bf16.msra.mxu0 0
    %870 = vmatprep.mubr.bf16.mxu0 0
    %871 = vmatmul.mubr.bf16.gmra.mxu0 %v836
    %v872 = vpop.f32.mrf.mxu0
    %v873 = vadd.f32 %v823, %v872
    %v874 = vpop.f32.mrf.mxu0
    %v875 = vpop.f32.mrf.mxu0
    %v876 = vadd.f32 %v826, %v875
    %v877 = vpop.f32.mrf.mxu0
    %878 = vdwg.mxu0
    %v879 = vld [vmem:[#allocation3 + $0x9] sm:$0xff]
    %v880 = vld [vmem:[#allocation3 + $0x21] sm:$0xff]
    %v881 = vpack.c.bf16 %v880, %v879
    %s882 = scalar_lea.vmem %s3, 16
    %v883 = vld [vmem:[%s882] sm:$0xf]
    %v884 = vld [vmem:[%s882 + $0x4] sm:$0xf]
    %v887 = vunpack.c.l.b16 %v883
    %v888 = vunpack.c.l.b16 %v884
    %v889 = vpack.c.b16 %v888, %v887
    %v892 = vsel %vm765, %v881, 0
    %894 = vmatprep.subr.bf16.mxu0 0
    %895 = vmatpush1.bf16.msra.mxu0 0
    %896 = vmatprep.subr.bf16.mxu0 0
    %897 = vmatpush1.bf16.msra.mxu0 0
    %898 = vmatprep.subr.bf16.mxu0 0
    %899 = vmatpush1.bf16.msra.mxu0 0
    %900 = vmatprep.subr.bf16.mxu0 0
    %901 = vmatpush1.bf16.msra.mxu0 0
    %902 = vmatprep.subr.bf16.mxu0 0
    %903 = vmatpush1.bf16.msra.mxu0 0
    %904 = vmatprep.subr.bf16.mxu0 0
    %905 = vmatpush1.bf16.msra.mxu0 0
    %906 = vmatprep.subr.bf16.mxu0 0
    %907 = vmatpush1.bf16.msra.mxu0 0
    %908 = vmatprep.subr.bf16.mxu0 0
    %909 = vmatpush1.bf16.msra.mxu0 %v889
    %910 = vmatprep.subr.bf16.mxu0 0
    %911 = vmatpush2.bf16.msra.mxu0 0
    %912 = vmatprep.subr.bf16.mxu0 0
    %913 = vmatpush2.bf16.msra.mxu0 0
    %914 = vmatprep.subr.bf16.mxu0 0
    %915 = vmatpush2.bf16.msra.mxu0 0
    %916 = vmatprep.subr.bf16.mxu0 0
    %917 = vmatpush2.bf16.msra.mxu0 0
    %918 = vmatprep.subr.bf16.mxu0 0
    %919 = vmatpush2.bf16.msra.mxu0 0
    %920 = vmatprep.subr.bf16.mxu0 0
    %921 = vmatpush2.bf16.msra.mxu0 0
    %922 = vmatprep.subr.bf16.mxu0 0
    %923 = vmatpush2.bf16.msra.mxu0 0
    %924 = vmatprep.subr.bf16.mxu0 0
    %925 = vmatpush2.bf16.msra.mxu0 0
    %926 = vmatprep.mubr.bf16.mxu0 0
    %927 = vmatmul.mubr.bf16.gmra.mxu0 %v892
    %v928 = vpop.f32.mrf.mxu0
    %v929 = vadd.f32 0.0, %v928
    %v930 = vpop.f32.mrf.mxu0
    %v931 = vpop.f32.mrf.mxu0
    %v932 = vadd.f32 0.0, %v931
    %v933 = vpop.f32.mrf.mxu0
    %934 = vdwg.mxu0
    %v935 = vadd.f32 %v873, %v929
    %v936 = vadd.f32 %v876, %v932
    %v937 = vlaneseq
    %v938 = vshrl.u32 %v937, 7
    %v939 = vsub.s32 0, %v938
    %v940 = vrot.slane %v759, %v939
    %v941 = vadd.f32 %v935, %v940
    %v942 = vadd.f32 %v936, %v940
    %v943 = vmax.f32 %v941, 0.0
    %v944 = vmax.f32 %v942, 0.0
    %vm945 = vcmask 261120
    %946 = vst.msk [vmem:[#allocation4] sm:$0xff] %vm945, %v943
    %947 = vst.msk [vmem:[#allocation4 + $0x8] sm:$0xff] %vm945, %v944
    %v948 = vld [vmem:[#allocation4] ss:$2 sm:$0xff]
    %s949 = scalar_lea.vmem [#allocation4], 1
    %v950 = vld [vmem:[%s949] ss:$2 sm:$0xff]
    %v951 = vmax.f32 %v948, %v950
    %v952 = vlaneseq
    %v953 = vshrl.u32 %v952, 7
    %v954 = vlaneseq
    %v955 = vand.u32 %v954, 127
    %v956 = vpack.c.bf16 %v951, %v951
    %v957 = vmul.u32 %v953, 4
    %vm958 = vcmp.ge.s32.totalorder %v955, %v957
    %v959 = vadd.s32 %v957, 2
    %vm960 = vcmp.lt.s32.totalorder %v955, %v959
    %vm961 = vmand %vm958, %vm960
    %v962 = vsel %vm961, 0.5, 0.0
    %v963 = vpack.c.bf16 %v962, %v962
    %v965 = vsel %vm443, %v963, 0
    %v968 = vsel %vm464, %v956, 0
    %970 = vmatprep.subr.bf16.mxu0 0
    %971 = vmatpush1.bf16.msra.mxu0 0
    %972 = vmatprep.subr.bf16.mxu0 0
    %973 = vmatpush1.bf16.msra.mxu0 0
    %974 = vmatprep.subr.bf16.mxu0 0
    %975 = vmatpush1.bf16.msra.mxu0 0
    %976 = vmatprep.subr.bf16.mxu0 0
    %977 = vmatpush1.bf16.msra.mxu0 0
    %978 = vmatprep.subr.bf16.mxu0 0
    %979 = vmatpush1.bf16.msra.mxu0 0
    %980 = vmatprep.subr.bf16.mxu0 0
    %981 = vmatpush1.bf16.msra.mxu0 0
    %982 = vmatprep.subr.bf16.mxu0 0
    %983 = vmatpush1.bf16.msra.mxu0 0
    %984 = vmatprep.subr.bf16.mxu0 0
    %985 = vmatpush1.bf16.msra.mxu0 %v968
    %986 = vmatprep.subr.bf16.mxu0 0
    %987 = vmatpush2.bf16.msra.mxu0 0
    %988 = vmatprep.subr.bf16.mxu0 0
    %989 = vmatpush2.bf16.msra.mxu0 0
    %990 = vmatprep.subr.bf16.mxu0 0
    %991 = vmatpush2.bf16.msra.mxu0 0
    %992 = vmatprep.subr.bf16.mxu0 0
    %993 = vmatpush2.bf16.msra.mxu0 0
    %994 = vmatprep.subr.bf16.mxu0 0
    %995 = vmatpush2.bf16.msra.mxu0 0
    %996 = vmatprep.subr.bf16.mxu0 0
    %997 = vmatpush2.bf16.msra.mxu0 0
    %998 = vmatprep.subr.bf16.mxu0 0
    %999 = vmatpush2.bf16.msra.mxu0 0
    %1000 = vmatprep.subr.bf16.mxu0 0
    %1001 = vmatpush2.bf16.msra.mxu0 0
    %1002 = vmatprep.mubr.bf16.mxu0 0
    %1003 = vmatmul.mubr.bf16.gmra.mxu0 %v965
    %v1004 = vpop.f32.mrf.mxu0
    %v1005 = vadd.f32 0.0, %v1004
    %v1006 = vpop.f32.mrf.mxu0
    %v1007 = vpop.f32.mrf.mxu0
    %v1008 = vpop.f32.mrf.mxu0
    %1009 = vdwg.mxu0
    %v1010 = vpack.c.bf16 %v1005, %v1005
    %v1011 = vld [vmem:[%s4] sm:$0xf]
    %v1012 = vld [vmem:[%s4 + $0x4] sm:$0xf]
    %v1013 = vld [vmem:[%s4 + $0x8] sm:$0xf]
    %v1014 = vld [vmem:[%s4 + $0xc] sm:$0xf]
    %vm1015 = vcmp.ge.s32.totalorder %v955, %v959
    %v1016 = vadd.s32 %v959, 2
    %vm1017 = vcmp.lt.s32.totalorder %v955, %v1016
    %vm1018 = vmand %vm1015, %vm1017
    %v1019 = vsel %vm1018, 0.5, 0.0
    %v1020 = vpack.c.bf16 %v1019, %v1019
    %v1022 = vsel %vm443, %v1020, 0
    %1024 = vmatprep.subr.bf16.mxu0 0
    %1025 = vmatpush1.bf16.msra.mxu0 0
    %1026 = vmatprep.subr.bf16.mxu0 0
    %1027 = vmatpush1.bf16.msra.mxu0 0
    %1028 = vmatprep.subr.bf16.mxu0 0
    %1029 = vmatpush1.bf16.msra.mxu0 0
    %1030 = vmatprep.subr.bf16.mxu0 0
    %1031 = vmatpush1.bf16.msra.mxu0 0
    %1032 = vmatprep.subr.bf16.mxu0 0
    %1033 = vmatpush1.bf16.msra.mxu0 0
    %1034 = vmatprep.subr.bf16.mxu0 0
    %1035 = vmatpush1.bf16.msra.mxu0 0
    %1036 = vmatprep.subr.bf16.mxu0 0
    %1037 = vmatpush1.bf16.msra.mxu0 0
    %1038 = vmatprep.subr.bf16.mxu0 0
    %1039 = vmatpush1.bf16.msra.mxu0 %v968
    %1040 = vmatprep.subr.bf16.mxu0 0
    %1041 = vmatpush2.bf16.msra.mxu0 0
    %1042 = vmatprep.subr.bf16.mxu0 0
    %1043 = vmatpush2.bf16.msra.mxu0 0
    %1044 = vmatprep.subr.bf16.mxu0 0
    %1045 = vmatpush2.bf16.msra.mxu0 0
    %1046 = vmatprep.subr.bf16.mxu0 0
    %1047 = vmatpush2.bf16.msra.mxu0 0
    %1048 = vmatprep.subr.bf16.mxu0 0
    %1049 = vmatpush2.bf16.msra.mxu0 0
    %1050 = vmatprep.subr.bf16.mxu0 0
    %1051 = vmatpush2.bf16.msra.mxu0 0
    %1052 = vmatprep.subr.bf16.mxu0 0
    %1053 = vmatpush2.bf16.msra.mxu0 0
    %1054 = vmatprep.subr.bf16.mxu0 0
    %1055 = vmatpush2.bf16.msra.mxu0 0
    %1056 = vmatprep.mubr.bf16.mxu0 0
    %1057 = vmatmul.mubr.bf16.gmra.mxu0 %v1022
    %v1058 = vpop.f32.mrf.mxu0
    %v1059 = vadd.f32 0.0, %v1058
    %v1060 = vpop.f32.mrf.mxu0
    %v1061 = vpop.f32.mrf.mxu0
    %v1062 = vpop.f32.mrf.mxu0
    %1063 = vdwg.mxu0
    %v1064 = vpack.c.bf16 %v1059, %v1059
    %s1065 = scalar_lea.vmem %s4, 16
    %v1066 = vld [vmem:[%s1065] sm:$0xf]
    %v1067 = vld [vmem:[%s1065 + $0x4] sm:$0xf]
    %v1068 = vld [vmem:[%s1065 + $0x8] sm:$0xf]
    %v1069 = vld [vmem:[%s1065 + $0xc] sm:$0xf]
    %v1074 = vunpack.c.l.b16 %v1066
    %v1075 = vunpack.c.l.b16 %v1067
    %v1076 = vunpack.c.l.b16 %v1068
    %v1077 = vunpack.c.l.b16 %v1069
    %v1078 = vpack.c.b16 %v1075, %v1074
    %v1079 = vpack.c.b16 %v1077, %v1076
    %v1083 = vsel %vm945, %v1064, 0
    %1085 = vmatprep.subr.bf16.mxu0 0
    %1086 = vmatpush1.bf16.msra.mxu0 0
    %1087 = vmatprep.subr.bf16.mxu0 0
    %1088 = vmatpush1.bf16.msra.mxu0 0
    %1089 = vmatprep.subr.bf16.mxu0 0
    %1090 = vmatpush1.bf16.msra.mxu0 0
    %1091 = vmatprep.subr.bf16.mxu0 0
    %1092 = vmatpush1.bf16.msra.mxu0 0
    %1093 = vmatprep.subr.bf16.mxu0 0
    %1094 = vmatpush1.bf16.msra.mxu0 0
    %1095 = vmatprep.subr.bf16.mxu0 0
    %1096 = vmatpush1.bf16.msra.mxu0 0
    %1097 = vmatprep.subr.bf16.mxu0 0
    %1098 = vmatpush1.bf16.msra.mxu0 %v1079
    %1099 = vmatprep.subr.bf16.mxu0 0
    %1100 = vmatpush1.bf16.msra.mxu0 %v1078
    %1101 = vmatprep.subr.bf16.mxu0 0
    %1102 = vmatpush2.bf16.msra.mxu0 0
    %1103 = vmatprep.subr.bf16.mxu0 0
    %1104 = vmatpush2.bf16.msra.mxu0 0
    %1105 = vmatprep.subr.bf16.mxu0 0
    %1106 = vmatpush2.bf16.msra.mxu0 0
    %1107 = vmatprep.subr.bf16.mxu0 0
    %1108 = vmatpush2.bf16.msra.mxu0 0
    %1109 = vmatprep.subr.bf16.mxu0 0
    %1110 = vmatpush2.bf16.msra.mxu0 0
    %1111 = vmatprep.subr.bf16.mxu0 0
    %1112 = vmatpush2.bf16.msra.mxu0 0
    %1113 = vmatprep.subr.bf16.mxu0 0
    %1114 = vmatpush2.bf16.msra.mxu0 0
    %1115 = vmatprep.subr.bf16.mxu0 0
    %1116 = vmatpush2.bf16.msra.mxu0 0
    %1117 = vmatprep.mubr.bf16.mxu0 0
    %1118 = vmatmul.mubr.bf16.gmra.mxu0 %v1083
    %v1119 = vpop.f32.mrf.mxu0
    %v1120 = vadd.f32 0.0, %v1119
    %v1121 = vpop.f32.mrf.mxu0
    %v1122 = vpop.f32.mrf.mxu0
    %v1123 = vpop.f32.mrf.mxu0
    %1124 = vdwg.mxu0
    %v1129 = vunpack.c.l.b16 %v1011
    %v1130 = vunpack.c.l.b16 %v1012
    %v1131 = vunpack.c.l.b16 %v1013
    %v1132 = vunpack.c.l.b16 %v1014
    %v1133 = vpack.c.b16 %v1130, %v1129
    %v1134 = vpack.c.b16 %v1132, %v1131
    %v1138 = vsel %vm945, %v1010, 0
    %1140 = vmatprep.subr.bf16.mxu0 0
    %1141 = vmatpush1.bf16.msra.mxu0 0
    %1142 = vmatprep.subr.bf16.mxu0 0
    %1143 = vmatpush1.bf16.msra.mxu0 0
    %1144 = vmatprep.subr.bf16.mxu0 0
    %1145 = vmatpush1.bf16.msra.mxu0 0
    %1146 = vmatprep.subr.bf16.mxu0 0
    %1147 = vmatpush1.bf16.msra.mxu0 0
    %1148 = vmatprep.subr.bf16.mxu0 0
    %1149 = vmatpush1.bf16.msra.mxu0 0
    %1150 = vmatprep.subr.bf16.mxu0 0
    %1151 = vmatpush1.bf16.msra.mxu0 0
    %1152 = vmatprep.subr.bf16.mxu0 0
    %1153 = vmatpush1.bf16.msra.mxu0 %v1134
    %1154 = vmatprep.subr.bf16.mxu0 0
    %1155 = vmatpush1.bf16.msra.mxu0 %v1133
    %1156 = vmatprep.subr.bf16.mxu0 0
    %1157 = vmatpush2.bf16.msra.mxu0 0
    %1158 = vmatprep.subr.bf16.mxu0 0
    %1159 = vmatpush2.bf16.msra.mxu0 0
    %1160 = vmatprep.subr.bf16.mxu0 0
    %1161 = vmatpush2.bf16.msra.mxu0 0
    %1162 = vmatprep.subr.bf16.mxu0 0
    %1163 = vmatpush2.bf16.msra.mxu0 0
    %1164 = vmatprep.subr.bf16.mxu0 0
    %1165 = vmatpush2.bf16.msra.mxu0 0
    %1166 = vmatprep.subr.bf16.mxu0 0
    %1167 = vmatpush2.bf16.msra.mxu0 0
    %1168 = vmatprep.subr.bf16.mxu0 0
    %1169 = vmatpush2.bf16.msra.mxu0 0
    %1170 = vmatprep.subr.bf16.mxu0 0
    %1171 = vmatpush2.bf16.msra.mxu0 0
    %1172 = vmatprep.mubr.bf16.mxu0 0
    %1173 = vmatmul.mubr.bf16.gmra.mxu0 %v1138
    %v1174 = vpop.f32.mrf.mxu0
    %v1175 = vadd.f32 %v1120, %v1174
    %v1176 = vpop.f32.mrf.mxu0
    %v1177 = vpop.f32.mrf.mxu0
    %v1178 = vpop.f32.mrf.mxu0
    %1179 = vdwg.mxu0
    %v1180 = vld [vmem:[%s7 + $0x3] sm:$0x1]
    %v1181 = vlaneseq
    %v1182 = vshrl.u32 %v1181, 7
    %v1183 = vsub.s32 0, %v1182
    %v1184 = vrot.slane %v1180, %v1183
    %v1185 = vadd.f32 %v1175, %v1184
    %v1186 = vmax.f32 %v1185, 0.0
    %v1187 = vpack.c.bf16 %v1186, %v1186
    %v1188 = vld [vmem:[%s5] sm:$0xf]
    %v1189 = vld [vmem:[%s5 + $0x4] sm:$0xf]
    %v1190 = vld [vmem:[%s5 + $0x8] sm:$0xf]
    %v1191 = vld [vmem:[%s5 + $0xc] sm:$0xf]
    %v1192 = vld [vmem:[%s7 + $0x4] sm:$0x1]
    %v1193 = vlaneseq
    %v1194 = vshrl.u32 %v1193, 7
    %v1195 = vsub.s32 0, %v1194
    %v1196 = vrot.slane %v1192, %v1195
    %v1201 = vunpack.c.l.b16 %v1188
    %v1202 = vunpack.c.l.b16 %v1189
    %v1203 = vunpack.c.l.b16 %v1190
    %v1204 = vunpack.c.l.b16 %v1191
    %v1205 = vpack.c.b16 %v1202, %v1201
    %v1206 = vpack.c.b16 %v1204, %v1203
    %v1210 = vsel %vm945, %v1187, 0
    %1212 = vmatprep.subr.bf16.mxu0 0
    %1213 = vmatpush1.bf16.msra.mxu0 0
    %1214 = vmatprep.subr.bf16.mxu0 0
    %1215 = vmatpush1.bf16.msra.mxu0 0
    %1216 = vmatprep.subr.bf16.mxu0 0
    %1217 = vmatpush1.bf16.msra.mxu0 0
    %1218 = vmatprep.subr.bf16.mxu0 0
    %1219 = vmatpush1.bf16.msra.mxu0 0
    %1220 = vmatprep.subr.bf16.mxu0 0
    %1221 = vmatpush1.bf16.msra.mxu0 0
    %1222 = vmatprep.subr.bf16.mxu0 0
    %1223 = vmatpush1.bf16.msra.mxu0 0
    %1224 = vmatprep.subr.bf16.mxu0 0
    %1225 = vmatpush1.bf16.msra.mxu0 %v1206
    %1226 = vmatprep.subr.bf16.mxu0 0
    %1227 = vmatpush1.bf16.msra.mxu0 %v1205
    %1228 = vmatprep.subr.bf16.mxu0 0
    %1229 = vmatpush2.bf16.msra.mxu0 0
    %1230 = vmatprep.subr.bf16.mxu0 0
    %1231 = vmatpush2.bf16.msra.mxu0 0
    %1232 = vmatprep.subr.bf16.mxu0 0
    %1233 = vmatpush2.bf16.msra.mxu0 0
    %1234 = vmatprep.subr.bf16.mxu0 0
    %1235 = vmatpush2.bf16.msra.mxu0 0
    %1236 = vmatprep.subr.bf16.mxu0 0
    %1237 = vmatpush2.bf16.msra.mxu0 0
    %1238 = vmatprep.subr.bf16.mxu0 0
    %1239 = vmatpush2.bf16.msra.mxu0 0
    %1240 = vmatprep.subr.bf16.mxu0 0
    %1241 = vmatpush2.bf16.msra.mxu0 0
    %1242 = vmatprep.subr.bf16.mxu0 0
    %1243 = vmatpush2.bf16.msra.mxu0 0
    %1244 = vmatprep.mubr.bf16.mxu0 0
    %1245 = vmatmul.mubr.bf16.gmra.mxu0 %v1210
    %v1246 = vpop.f32.mrf.mxu0
    %v1247 = vadd.f32 %v1196, %v1246
    %v1248 = vpop.f32.mrf.mxu0
    %v1249 = vpop.f32.mrf.mxu0
    %v1250 = vpop.f32.mrf.mxu0
    %1251 = vdwg.mxu0
    %v1252 = vmax.f32 %v1247, 0.0
    %v1253 = vpack.c.bf16 %v1252, %v1252
    %v1254 = vld [vmem:[%s6] sm:$0xf]
    %v1255 = vld [vmem:[%s6 + $0x4] sm:$0xf]
    %v1256 = vld [vmem:[%s7 + $0x5] sm:$0x1]
    %v1257 = vlaneseq
    %v1258 = vshrl.u32 %v1257, 7
    %v1259 = vsub.s32 0, %v1258
    %v1260 = vrot.slane %v1256, %v1259
    %v1263 = vunpack.c.l.b16 %v1254
    %v1264 = vunpack.c.l.b16 %v1255
    %v1265 = vpack.c.b16 %v1264, %v1263
    %v1268 = vsel %vm765, %v1253, 0
    %1270 = vmatprep.subr.bf16.mxu0 0
    %1271 = vmatpush1.bf16.msra.mxu0 0
    %1272 = vmatprep.subr.bf16.mxu0 0
    %1273 = vmatpush1.bf16.msra.mxu0 0
    %1274 = vmatprep.subr.bf16.mxu0 0
    %1275 = vmatpush1.bf16.msra.mxu0 0
    %1276 = vmatprep.subr.bf16.mxu0 0
    %1277 = vmatpush1.bf16.msra.mxu0 0
    %1278 = vmatprep.subr.bf16.mxu0 0
    %1279 = vmatpush1.bf16.msra.mxu0 0
    %1280 = vmatprep.subr.bf16.mxu0 0
    %1281 = vmatpush1.bf16.msra.mxu0 0
    %1282 = vmatprep.subr.bf16.mxu0 0
    %1283 = vmatpush1.bf16.msra.mxu0 0
    %1284 = vmatprep.subr.bf16.mxu0 0
    %1285 = vmatpush1.bf16.msra.mxu0 %v1265
    %1286 = vmatprep.subr.bf16.mxu0 0
    %1287 = vmatpush2.bf16.msra.mxu0 0
    %1288 = vmatprep.subr.bf16.mxu0 0
    %1289 = vmatpush2.bf16.msra.mxu0 0
    %1290 = vmatprep.subr.bf16.mxu0 0
    %1291 = vmatpush2.bf16.msra.mxu0 0
    %1292 = vmatprep.subr.bf16.mxu0 0
    %1293 = vmatpush2.bf16.msra.mxu0 0
    %1294 = vmatprep.subr.bf16.mxu0 0
    %1295 = vmatpush2.bf16.msra.mxu0 0
    %1296 = vmatprep.subr.bf16.mxu0 0
    %1297 = vmatpush2.bf16.msra.mxu0 0
    %1298 = vmatprep.subr.bf16.mxu0 0
    %1299 = vmatpush2.bf16.msra.mxu0 0
    %1300 = vmatprep.subr.bf16.mxu0 0
    %1301 = vmatpush2.bf16.msra.mxu0 0
    %1302 = vmatprep.mubr.bf16.mxu0 0
    %1303 = vmatmul.mubr.bf16.gmra.mxu0 %v1268
    %v1304 = vpop.f32.mrf.mxu0
    %v1305 = vadd.f32 %v1260, %v1304
    %v1306 = vpop.f32.mrf.mxu0
    %v1307 = vpop.f32.mrf.mxu0
    %v1308 = vpop.f32.mrf.mxu0
    %1309 = vdwg.mxu0
    %1310 = vst [vmem:[#allocation5] sm:$0x3] %v1305
    // Predicated region
    $region34: #{_lambda_.1} parent=1 // pred_check
      _
    $region35: #{_lambda_.1} parent=1 // pred_check_branch
      %1312 = sbr.rel (0) target = $region37
    $region36: #{_lambda_.1} parent=1 // pred_region
      %s1314 = ssub.s32 32, 32
      %1315 = vsyncadd [#allocation6], %s1314
      %s1317 = sshll.u32 [#allocation5], 4
      %s1318 = int_to_ptr.vmem [resolvable:$true] %s1317
      %1320 = dma.vmem_to_hbm [thread:$0]  %s1318, 32, %s8, [#allocation6]
    $region37: #{_lambda_.1} parent=1 // pred_fallthru
      _
    // Predicated region
    $region38: #{_lambda_.1} parent=1 // pred_check
      _
    $region39: #{_lambda_.1} parent=1 // pred_check_branch
      %1322 = sbr.rel (0) target = $region41
    $region40: #{_lambda_.1} parent=1 // pred_region
      %1323 = dma.done [#allocation6], 32
    $region41: #{_lambda_.1} parent=1 // pred_fallthru
      _
    %1324 = vsyncpa [#allocation6], 1

</llo_original>
